<compile_context>
chip_gen: v7x
topology: tpu7x:2x2x1
jax: 0.10.0
libtpu: 0.0.40
codegen_flags: <defaults>
</compile_context>

<pallas_src>
import jax
import jax.numpy as jnp
from jax.experimental import pallas as pl
from jax.experimental.pallas import tpu as pltpu

N_ATOMS = 16          # number of atoms (small demo size)
NUM_FEATURES = 128    # F (fixed by Lr: Linear(128, 64))
NUM_RBF = 20
CUTOFF = 5.0
NUM_MP_LAYERS = 3
HIDDEN_READOUT = 64
RBF_GAMMA = (float(NUM_RBF) / CUTOFF) ** 2

K_RBF = (NUM_RBF + 1) * N_ATOMS                     # 336 (RBF channels + bias) x source atoms
K_PAD = ((K_RBF + 127) // 128) * 128                # 384: no ragged MXU pass
assert K_PAD % N_ATOMS == 0


def _silu(x):
    # SiLU via exp (guaranteed Mosaic lowering).
    return x * (1.0 / (1.0 + jnp.exp(-x)))


def painn_kernel(
    si0_ref,                                        # (N, F)      f32
    a_s_ref,                                        # (N, K_PAD)  bf16  stacked fcut*rbf (scalar channel)
    a_v3_ref,                                       # (3N, K_PAD) bf16  stacked fcut*u*rbf (x/y/z planes)
    ws_sv_exp_ref,                                  # (K_PAD, 2F) f32   row-expanded [rbf_ws | rbf_wv] (+bias, +zero pad)
    phi_w1_ref, phi_b1_ref, phi_w2sv_ref, phi_b2sv_ref,
    uv_w_ref,                                       # (F, 2F)  bf16  [u_w | v_w]
    a_w1_ref,                                       # (2F, F)  bf16  [a_w1s ; a_w1v]
    a_b1_ref, a_w2_ref, a_b2_ref,
    r_w1_ref, r_b1_ref, r_w2_ref, r_b2_ref,
    sigma_ref,
):
    N, F = N_ATOMS, NUM_FEATURES
    f32 = jnp.float32
    bf16 = jnp.bfloat16

    def bdot(act, w_ref):
        # f32 activation x pre-cast bf16 weight (read at the dot site), f32 accumulation.
        return jnp.dot(act.astype(bf16), w_ref[...], preferred_element_type=f32)

    si0 = si0_ref[...]                              # (N, F) f32

    # ---------------- message block (Lm): phi MLP, fused s|v gate head -----
    phi_h = _silu(bdot(si0, phi_w1_ref) + phi_b1_ref[...])
    phi_sv = bdot(phi_h, phi_w2sv_ref) + phi_b2sv_ref[...]      # (N, 2F) = [phi_s | phi_v]
    # (the v_j gate third of the canonical 3F head multiplies v_j, which is
    #  identically zero in this forward, so it is skipped.)

    # ---------------- stacked-K RBF filter contraction ---------------------
    # B[n*N + j, :] = rbf_w[n, :] * phi[j, :]  (last row-block = rbf bias).
    # Built as (row-expanded rbf weights) * (sublane-tiled phi); the tiling is a
    # one-time sublane copy (~100 cycles), no lane-axis relayout involved.
    reps = K_PAD // N
    phi_rep = jnp.concatenate([phi_sv] * reps, axis=0)          # (K_PAD, 2F) f32
    b_sv = (ws_sv_exp_ref[...] * phi_rep).astype(bf16)          # (K_PAD, 2F) bf16
    b_s = b_sv[:, :F]                                           # (K_PAD, F)
    b_v = b_sv[:, F:]                                           # (K_PAD, F)

    # Two deep MXU matmuls (K = K_PAD) replace the old 40+ K=16 matmuls.
    d_sim = jnp.dot(a_s_ref[...], b_s, preferred_element_type=f32)     # (N, F)
    d_vim3 = jnp.dot(a_v3_ref[...], b_v, preferred_element_type=f32)   # (3N, F): x/y/z planes

    # ---------------- message-passing loop (Lu) ----------------------------
    # Bias broadcasts hoisted out of the unrolled loop (no per-iteration
    # re-materialisation of broadcast_in_dim).
    a_b1 = jnp.broadcast_to(a_b1_ref[...], (N, F))
    a_b2 = jnp.broadcast_to(a_b2_ref[...], (N, 3 * F))

    si = si0
    v3 = jnp.zeros((3 * N, F), f32)

    for _ in range(NUM_MP_LAYERS):
        # message contribution (constant across iterations, as in the source)
        si = si + d_sim
        v3 = v3 + d_vim3

        # fused U/V channel mixing: one (3N, F) x (F, 2F) dot per iteration
        uv3 = bdot(v3, uv_w_ref)                    # (3N, 2F) = [U3 | V3]
        u3 = uv3[:, :F]
        v3m = uv3[:, F:]
        ux, uy, uz = u3[:N, :], u3[N:2 * N, :], u3[2 * N:, :]
        vx, vy, vz = v3m[:N, :], v3m[N:2 * N, :], v3m[2 * N:, :]
        vnorm = jnp.sqrt(vx * vx + vy * vy + vz * vz + 1e-8)

        # fused gate MLP input: [si | vnorm] -> one K=2F dot (128-aligned lane concat)
        a_h = _silu(bdot(jnp.concatenate([si, vnorm], axis=1), a_w1_ref) + a_b1)
        a = bdot(a_h, a_w2_ref) + a_b2              # (N, 3F)
        a_vv = a[:, :F]
        a_sv = a[:, F:2 * F]
        a_ss = a[:, 2 * F:]

        dot_uv = ux * vx + uy * vy + uz * vz
        si = si + a_sv * dot_uv + a_ss
        # per-plane gating on slices; one tiny (3N, F) sublane reassembly copy
        # (~6 vregs) instead of tiling the gate or re-pushing UV weights 3x.
        v3 = v3 + jnp.concatenate([a_vv * ux, a_vv * uy, a_vv * uz], axis=0)

    # ---------------- readout (Lr): Linear(128,64) -> SiLU -> Linear(64,1) --
    h = _silu(bdot(si, r_w1_ref) + r_b1_ref[...])
    sigma = jnp.sum(h * r_w2_ref[...], axis=1, keepdims=True) + r_b2_ref[...]
    sigma_ref[...] = sigma                          # (N, 1)


def _full_spec(shape):
    nd = len(shape)
    return pl.BlockSpec(shape, lambda i, nd=nd: (0,) * nd)


@jax.jit
def painn_forward(atoms, positions, graph_idx, params):
    """Glue: embedding gather + lane-dense geometry/RBF slab + weight packing (plain JAX)."""
    f32 = jnp.float32
    bf16 = jnp.bfloat16
    N, F, NR = N_ATOMS, NUM_FEATURES, NUM_RBF

    si0 = params["embedding"][atoms].astype(f32)                    # (N, F)

    # ---- pairwise geometry + parameter-free RBF/cutoff envelope -----------
    pos = positions.astype(f32)                                     # (N, 3)
    rij = pos[None, :, :] - pos[:, None, :]                         # rij[i, j] = pos[j] - pos[i]
    d2 = jnp.sum(rij * rij, axis=-1)
    d = jnp.sqrt(d2 + 1e-12)                                        # (N, N)
    g = graph_idx.astype(jnp.int32)
    same = (g[:, None] == g[None, :]).astype(f32)
    idx = jnp.arange(N)
    notself = (idx[:, None] != idx[None, :]).astype(f32)
    edge_mask = (d <= CUTOFF).astype(f32) * notself * same
    d_safe = d + (1.0 - edge_mask)
    u = rij / d_safe[:, :, None]                                    # unit vectors (N, N, 3)
    t = d * (1.0 / CUTOFF)
    fcut = (1.0 - t * t) ** 2 * edge_mask                           # smooth cutoff, masked

    mus = jnp.arange(NR, dtype=f32) * (CUTOFF / (NR - 1))
    rbf = jnp.exp(-RBF_GAMMA * (d[:, :, None] - mus) ** 2)          # (N, N, NR)
    rbf_ext = jnp.concatenate([rbf, jnp.ones((N, N, 1), f32)], axis=-1)  # +bias channel

    def stack_k(w):
        # (N, N) pair weights -> (N, K_PAD) with column index n*N + j
        a = jnp.transpose(w[:, :, None] * rbf_ext, (0, 2, 1)).reshape(N, K_RBF)
        return jnp.pad(a, ((0, 0), (0, K_PAD - K_RBF)))

    a_s = stack_k(fcut).astype(bf16)                                # (N, K_PAD)
    a_v3 = jnp.concatenate(
        [stack_k(fcut * u[:, :, 0]),
         stack_k(fcut * u[:, :, 1]),
         stack_k(fcut * u[:, :, 2])], axis=0).astype(bf16)          # (3N, K_PAD)

    # ---- RBF filter weights, row-expanded to match the stacked-K layout ----
    ws_sv = jnp.concatenate(
        [jnp.concatenate([params["rbf_ws"], params["rbf_wv"]], axis=1),
         jnp.concatenate([params["rbf_bs"], params["rbf_bv"]], axis=1)], axis=0)  # (NR+1, 2F)
    ws_sv_exp = jnp.repeat(ws_sv, N, axis=0)                        # (336, 2F): row n*N+j = row n
    ws_sv_exp = jnp.pad(ws_sv_exp, ((0, K_PAD - K_RBF), (0, 0)))    # (K_PAD, 2F) f32

    # ---- fused / pre-cast weight layouts (MXU operands bf16, f32 accum) ----
    def wb(x):
        return x.astype(bf16)

    phi_w2sv = jnp.concatenate([params["phi_w2s"], params["phi_w2v"]], axis=1)   # (F, 2F)
    phi_b2sv = jnp.concatenate([params["phi_b2s"], params["phi_b2v"]], axis=1)   # (1, 2F)
    uv_w = jnp.concatenate([params["u_w"], params["v_w"]], axis=1)               # (F, 2F)
    a_w1 = jnp.concatenate([params["a_w1s"], params["a_w1v"]], axis=0)           # (2F, F)

    args = [
        si0, a_s, a_v3, ws_sv_exp,
        wb(params["phi_w1"]), params["phi_b1"], wb(phi_w2sv), phi_b2sv,
        wb(uv_w), wb(a_w1), params["a_b1"], wb(params["a_w2"]), params["a_b2"],
        wb(params["r_w1"]), params["r_b1"], params["r_w2"], params["r_b2"],
    ]
    in_specs = [_full_spec(a.shape) for a in args]

    return pl.pallas_call(
        painn_kernel,
        grid=(1,),
        in_specs=in_specs,
        out_specs=_full_spec((N_ATOMS, 1)),
        out_shape=jax.ShapeDtypeStruct((N_ATOMS, 1), jnp.float32),
        compiler_params=pltpu.CompilerParams(dimension_semantics=("arbitrary",)),
    )(*args)


def init_params(key):
    F, NR = NUM_FEATURES, NUM_RBF
    ks = jax.random.split(key, 12)

    def lin(k, fan_in, shape):
        return jax.random.normal(k, shape, jnp.float32) / jnp.sqrt(float(fan_in))

    p = {}
    p["embedding"] = jax.random.normal(ks[0], (100, F), jnp.float32)  # nn.Embedding(100, 128)
    # message block MLP: F -> F -> 3F (only the s- and v-gate thirds are used)
    p["phi_w1"] = lin(ks[1], F, (F, F))
    p["phi_b1"] = jnp.zeros((1, F), jnp.float32)
    phi_w2 = lin(ks[2], F, (F, 3 * F))
    p["phi_w2s"] = phi_w2[:, F:2 * F]
    p["phi_b2s"] = jnp.zeros((1, F), jnp.float32)
    p["phi_w2v"] = phi_w2[:, 2 * F:3 * F]
    p["phi_b2v"] = jnp.zeros((1, F), jnp.float32)
    # RBF filter Linear(NUM_RBF -> 3F), split into the two non-zero parts
    rbf_w = lin(ks[3], NR, (NR, 3 * F))
    rbf_b = jnp.zeros((1, 3 * F), jnp.float32)
    p["rbf_ws"] = rbf_w[:, F:2 * F]
    p["rbf_wv"] = rbf_w[:, 2 * F:3 * F]
    p["rbf_bs"] = rbf_b[:, F:2 * F]
    p["rbf_bv"] = rbf_b[:, 2 * F:3 * F]
    # update block
    p["u_w"] = lin(ks[4], F, (F, F))
    p["v_w"] = lin(ks[5], F, (F, F))
    a_w1 = lin(ks[6], 2 * F, (2 * F, F))
    p["a_w1s"] = a_w1[:F, :]
    p["a_w1v"] = a_w1[F:, :]
    p["a_b1"] = jnp.zeros((1, F), jnp.float32)
    p["a_w2"] = lin(ks[7], F, (F, 3 * F))
    p["a_b2"] = jnp.zeros((1, 3 * F), jnp.float32)
    # readout Lr: Linear(128,64) -> SiLU -> Linear(64,1)
    p["r_w1"] = lin(ks[8], F, (F, HIDDEN_READOUT))
    p["r_b1"] = jnp.zeros((1, HIDDEN_READOUT), jnp.float32)
    p["r_w2"] = lin(ks[9], HIDDEN_READOUT, (1, HIDDEN_READOUT))       # row form of (64, 1)
    p["r_b2"] = jnp.zeros((1, 1), jnp.float32)
    return p


if __name__ == "__main__":
    key = jax.random.PRNGKey(0)
    kp, ka, kx = jax.random.split(key, 3)
    params = init_params(kp)

    atoms = jax.random.randint(ka, (N_ATOMS,), 0, 100)                          # LongTensor atoms
    atom_positions = jax.random.uniform(kx, (N_ATOMS, 3), jnp.float32, 0.0, 4.0)
    graph_indexes = jnp.array([0] * (N_ATOMS // 2) + [1] * (N_ATOMS // 2), jnp.int32)

    sigma = painn_forward(atoms, atom_positions, graph_indexes, params)
    sigma = jax.block_until_ready(sigma)

    assert sigma.shape == (N_ATOMS, 1)
    assert bool(jnp.all(jnp.isfinite(sigma)))
    print("KERNEL_OK")
</pallas_src>

<mosaic_0001>
module attributes {stable_mosaic.version = 11 : i64} {
  func.func @painn_kernel(%arg0: i32, %arg1: memref<16x128xf32, #tpu.memory_space<vmem>>, %arg2: memref<16x384xbf16, #tpu.memory_space<vmem>>, %arg3: memref<48x384xbf16, #tpu.memory_space<vmem>>, %arg4: memref<384x256xf32, #tpu.memory_space<vmem>>, %arg5: memref<128x128xbf16, #tpu.memory_space<vmem>>, %arg6: memref<1x128xf32, #tpu.memory_space<vmem>>, %arg7: memref<128x256xbf16, #tpu.memory_space<vmem>>, %arg8: memref<1x256xf32, #tpu.memory_space<vmem>>, %arg9: memref<128x256xbf16, #tpu.memory_space<vmem>>, %arg10: memref<256x128xbf16, #tpu.memory_space<vmem>>, %arg11: memref<1x128xf32, #tpu.memory_space<vmem>>, %arg12: memref<128x384xbf16, #tpu.memory_space<vmem>>, %arg13: memref<1x384xf32, #tpu.memory_space<vmem>>, %arg14: memref<128x64xbf16, #tpu.memory_space<vmem>>, %arg15: memref<1x64xf32, #tpu.memory_space<vmem>>, %arg16: memref<1x64xf32, #tpu.memory_space<vmem>>, %arg17: memref<1x1xf32, #tpu.memory_space<vmem>>, %arg18: memref<16x1xf32, #tpu.memory_space<vmem>>) attributes {dimension_semantics = [#tpu.dimension_semantics<arbitrary>], iteration_bounds = array<i64: 1>, scalar_prefetch = 0 : i64, scratch_operands = 0 : i64, tpu.core_type = #tpu.core_type<tc>, window_params = [{pipeline_mode = #tpu.pipeline_mode<synchronous>, transform_indices = @transform_0, window_bounds = array<i64: 16, 128>}, {pipeline_mode = #tpu.pipeline_mode<synchronous>, transform_indices = @transform_1, window_bounds = array<i64: 16, 384>}, {pipeline_mode = #tpu.pipeline_mode<synchronous>, transform_indices = @transform_2, window_bounds = array<i64: 48, 384>}, {pipeline_mode = #tpu.pipeline_mode<synchronous>, transform_indices = @transform_3, window_bounds = array<i64: 384, 256>}, {pipeline_mode = #tpu.pipeline_mode<synchronous>, transform_indices = @transform_4, window_bounds = array<i64: 128, 128>}, {pipeline_mode = #tpu.pipeline_mode<synchronous>, transform_indices = @transform_5, window_bounds = array<i64: 1, 128>}, {pipeline_mode = #tpu.pipeline_mode<synchronous>, transform_indices = @transform_6, window_bounds = array<i64: 128, 256>}, {pipeline_mode = #tpu.pipeline_mode<synchronous>, transform_indices = @transform_7, window_bounds = array<i64: 1, 256>}, {pipeline_mode = #tpu.pipeline_mode<synchronous>, transform_indices = @transform_8, window_bounds = array<i64: 128, 256>}, {pipeline_mode = #tpu.pipeline_mode<synchronous>, transform_indices = @transform_9, window_bounds = array<i64: 256, 128>}, {pipeline_mode = #tpu.pipeline_mode<synchronous>, transform_indices = @transform_10, window_bounds = array<i64: 1, 128>}, {pipeline_mode = #tpu.pipeline_mode<synchronous>, transform_indices = @transform_11, window_bounds = array<i64: 128, 384>}, {pipeline_mode = #tpu.pipeline_mode<synchronous>, transform_indices = @transform_12, window_bounds = array<i64: 1, 384>}, {pipeline_mode = #tpu.pipeline_mode<synchronous>, transform_indices = @transform_13, window_bounds = array<i64: 128, 64>}, {pipeline_mode = #tpu.pipeline_mode<synchronous>, transform_indices = @transform_14, window_bounds = array<i64: 1, 64>}, {pipeline_mode = #tpu.pipeline_mode<synchronous>, transform_indices = @transform_15, window_bounds = array<i64: 1, 64>}, {pipeline_mode = #tpu.pipeline_mode<synchronous>, transform_indices = @transform_16, window_bounds = array<i64: 1, 1>}, {pipeline_mode = #tpu.pipeline_mode<synchronous>, transform_indices = @transform_17, window_bounds = array<i64: 16, 1>}]} {
    %c0 = arith.constant 0 : index
    %c0_0 = arith.constant 0 : index
    %0 = vector.load %arg1[%c0, %c0_0] : memref<16x128xf32, #tpu.memory_space<vmem>>, vector<16x128xf32>
    %1 = arith.truncf %0 : vector<16x128xf32> to vector<16x128xbf16>
    %c0_1 = arith.constant 0 : index
    %c0_2 = arith.constant 0 : index
    %2 = vector.load %arg5[%c0_1, %c0_2] : memref<128x128xbf16, #tpu.memory_space<vmem>>, vector<128x128xbf16>
    %cst = arith.constant dense<0.000000e+00> : vector<16x128xf32>
    %3 = tpu.matmul %1, %2, %cst {dimension_numbers = #tpu.dot_dimension_numbers<[1], [0], [0], [1], [0, 0, 1, 1], [], []>} : vector<16x128xbf16>, vector<128x128xbf16>, vector<16x128xf32> -> vector<16x128xf32>
    %c0_3 = arith.constant 0 : index
    %c0_4 = arith.constant 0 : index
    %4 = vector.load %arg6[%c0_3, %c0_4] : memref<1x128xf32, #tpu.memory_space<vmem>>, vector<1x128xf32>
    %5 = vector.broadcast %4 : vector<1x128xf32> to vector<16x128xf32>
    %6 = arith.addf %3, %5 : vector<16x128xf32>
    %cst_5 = arith.constant 0.000000e+00 : f32
    %7 = vector.broadcast %cst_5 : f32 to vector<16x128xf32>
    %8 = arith.subf %7, %6 : vector<16x128xf32>
    %9 = math.exp %8 : vector<16x128xf32>
    %cst_6 = arith.constant 1.000000e+00 : f32
    %10 = vector.broadcast %cst_6 : f32 to vector<16x128xf32>
    %11 = arith.addf %10, %9 : vector<16x128xf32>
    %cst_7 = arith.constant 1.000000e+00 : f32
    %12 = vector.broadcast %cst_7 : f32 to vector<16x128xf32>
    %13 = arith.divf %12, %11 : vector<16x128xf32>
    %14 = arith.mulf %6, %13 : vector<16x128xf32>
    %15 = arith.truncf %14 : vector<16x128xf32> to vector<16x128xbf16>
    %c0_8 = arith.constant 0 : index
    %c0_9 = arith.constant 0 : index
    %16 = vector.load %arg7[%c0_8, %c0_9] : memref<128x256xbf16, #tpu.memory_space<vmem>>, vector<128x256xbf16>
    %cst_10 = arith.constant dense<0.000000e+00> : vector<16x256xf32>
    %17 = tpu.matmul %15, %16, %cst_10 {dimension_numbers = #tpu.dot_dimension_numbers<[1], [0], [0], [1], [0, 0, 1, 1], [], []>} : vector<16x128xbf16>, vector<128x256xbf16>, vector<16x256xf32> -> vector<16x256xf32>
    %c0_11 = arith.constant 0 : index
    %c0_12 = arith.constant 0 : index
    %18 = vector.load %arg8[%c0_11, %c0_12] : memref<1x256xf32, #tpu.memory_space<vmem>>, vector<1x256xf32>
    %19 = vector.broadcast %18 : vector<1x256xf32> to vector<16x256xf32>
    %20 = arith.addf %17, %19 : vector<16x256xf32>
    %21 = tpu.concatenate %20, %20, %20, %20, %20, %20, %20, %20, %20, %20, %20, %20, %20, %20, %20, %20 in 0 : vector<16x256xf32>, vector<16x256xf32>, vector<16x256xf32>, vector<16x256xf32>, vector<16x256xf32>, vector<16x256xf32>, vector<16x256xf32>, vector<16x256xf32>, vector<16x256xf32>, vector<16x256xf32>, vector<16x256xf32>, vector<16x256xf32>, vector<16x256xf32>, vector<16x256xf32>, vector<16x256xf32>, vector<16x256xf32> -> vector<256x256xf32>
    %22 = tpu.concatenate %20, %20, %20, %20, %20, %20, %20, %20 in 0 : vector<16x256xf32>, vector<16x256xf32>, vector<16x256xf32>, vector<16x256xf32>, vector<16x256xf32>, vector<16x256xf32>, vector<16x256xf32>, vector<16x256xf32> -> vector<128x256xf32>
    %23 = tpu.concatenate %21, %22 in 0 : vector<256x256xf32>, vector<128x256xf32> -> vector<384x256xf32>
    %c0_13 = arith.constant 0 : index
    %c0_14 = arith.constant 0 : index
    %24 = vector.load %arg4[%c0_13, %c0_14] : memref<384x256xf32, #tpu.memory_space<vmem>>, vector<384x256xf32>
    %25 = arith.mulf %24, %23 : vector<384x256xf32>
    %26 = arith.truncf %25 : vector<384x256xf32> to vector<384x256xbf16>
    %27 = vector.extract_strided_slice %26 {offsets = [0, 0], sizes = [384, 128], strides = [1, 1]} : vector<384x256xbf16> to vector<384x128xbf16>
    %28 = vector.extract_strided_slice %26 {offsets = [0, 128], sizes = [384, 128], strides = [1, 1]} : vector<384x256xbf16> to vector<384x128xbf16>
    %c0_15 = arith.constant 0 : index
    %c0_16 = arith.constant 0 : index
    %29 = vector.load %arg2[%c0_15, %c0_16] : memref<16x384xbf16, #tpu.memory_space<vmem>>, vector<16x384xbf16>
    %cst_17 = arith.constant dense<0.000000e+00> : vector<16x128xf32>
    %30 = tpu.matmul %29, %27, %cst_17 {dimension_numbers = #tpu.dot_dimension_numbers<[1], [0], [0], [1], [0, 0, 1, 1], [], []>} : vector<16x384xbf16>, vector<384x128xbf16>, vector<16x128xf32> -> vector<16x128xf32>
    %c0_18 = arith.constant 0 : index
    %c0_19 = arith.constant 0 : index
    %31 = vector.load %arg3[%c0_18, %c0_19] : memref<48x384xbf16, #tpu.memory_space<vmem>>, vector<48x384xbf16>
    %cst_20 = arith.constant dense<0.000000e+00> : vector<48x128xf32>
    %32 = tpu.matmul %31, %28, %cst_20 {dimension_numbers = #tpu.dot_dimension_numbers<[1], [0], [0], [1], [0, 0, 1, 1], [], []>} : vector<48x384xbf16>, vector<384x128xbf16>, vector<48x128xf32> -> vector<48x128xf32>
    %c0_21 = arith.constant 0 : index
    %c0_22 = arith.constant 0 : index
    %33 = vector.load %arg11[%c0_21, %c0_22] : memref<1x128xf32, #tpu.memory_space<vmem>>, vector<1x128xf32>
    %34 = vector.shape_cast %33 : vector<1x128xf32> to vector<1x128xf32>
    %35 = vector.broadcast %34 : vector<1x128xf32> to vector<16x128xf32>
    %c0_23 = arith.constant 0 : index
    %c0_24 = arith.constant 0 : index
    %36 = vector.load %arg13[%c0_23, %c0_24] : memref<1x384xf32, #tpu.memory_space<vmem>>, vector<1x384xf32>
    %37 = vector.shape_cast %36 : vector<1x384xf32> to vector<1x384xf32>
    %38 = vector.broadcast %37 : vector<1x384xf32> to vector<16x384xf32>
    %cst_25 = arith.constant 0.000000e+00 : f32
    %39 = vector.broadcast %cst_25 : f32 to vector<48x128xf32>
    %40 = arith.addf %0, %30 : vector<16x128xf32>
    %41 = arith.addf %39, %32 : vector<48x128xf32>
    %42 = arith.truncf %41 : vector<48x128xf32> to vector<48x128xbf16>
    %c0_26 = arith.constant 0 : index
    %c0_27 = arith.constant 0 : index
    %43 = vector.load %arg9[%c0_26, %c0_27] : memref<128x256xbf16, #tpu.memory_space<vmem>>, vector<128x256xbf16>
    %cst_28 = arith.constant dense<0.000000e+00> : vector<48x256xf32>
    %44 = tpu.matmul %42, %43, %cst_28 {dimension_numbers = #tpu.dot_dimension_numbers<[1], [0], [0], [1], [0, 0, 1, 1], [], []>} : vector<48x128xbf16>, vector<128x256xbf16>, vector<48x256xf32> -> vector<48x256xf32>
    %45 = vector.extract_strided_slice %44 {offsets = [0, 0], sizes = [48, 128], strides = [1, 1]} : vector<48x256xf32> to vector<48x128xf32>
    %46 = vector.extract_strided_slice %44 {offsets = [0, 128], sizes = [48, 128], strides = [1, 1]} : vector<48x256xf32> to vector<48x128xf32>
    %47 = vector.extract_strided_slice %45 {offsets = [0, 0], sizes = [16, 128], strides = [1, 1]} : vector<48x128xf32> to vector<16x128xf32>
    %48 = vector.extract_strided_slice %45 {offsets = [16, 0], sizes = [16, 128], strides = [1, 1]} : vector<48x128xf32> to vector<16x128xf32>
    %49 = vector.extract_strided_slice %45 {offsets = [32, 0], sizes = [16, 128], strides = [1, 1]} : vector<48x128xf32> to vector<16x128xf32>
    %50 = vector.extract_strided_slice %46 {offsets = [0, 0], sizes = [16, 128], strides = [1, 1]} : vector<48x128xf32> to vector<16x128xf32>
    %51 = vector.extract_strided_slice %46 {offsets = [16, 0], sizes = [16, 128], strides = [1, 1]} : vector<48x128xf32> to vector<16x128xf32>
    %52 = vector.extract_strided_slice %46 {offsets = [32, 0], sizes = [16, 128], strides = [1, 1]} : vector<48x128xf32> to vector<16x128xf32>
    %53 = arith.mulf %50, %50 : vector<16x128xf32>
    %54 = arith.mulf %51, %51 : vector<16x128xf32>
    %55 = arith.addf %53, %54 : vector<16x128xf32>
    %56 = arith.mulf %52, %52 : vector<16x128xf32>
    %57 = arith.addf %55, %56 : vector<16x128xf32>
    %cst_29 = arith.constant 9.99999993E-9 : f32
    %58 = vector.broadcast %cst_29 : f32 to vector<16x128xf32>
    %59 = arith.addf %57, %58 : vector<16x128xf32>
    %60 = math.sqrt %59 : vector<16x128xf32>
    %61 = tpu.concatenate %40, %60 in 1 : vector<16x128xf32>, vector<16x128xf32> -> vector<16x256xf32>
    %62 = arith.truncf %61 : vector<16x256xf32> to vector<16x256xbf16>
    %c0_30 = arith.constant 0 : index
    %c0_31 = arith.constant 0 : index
    %63 = vector.load %arg10[%c0_30, %c0_31] : memref<256x128xbf16, #tpu.memory_space<vmem>>, vector<256x128xbf16>
    %cst_32 = arith.constant dense<0.000000e+00> : vector<16x128xf32>
    %64 = tpu.matmul %62, %63, %cst_32 {dimension_numbers = #tpu.dot_dimension_numbers<[1], [0], [0], [1], [0, 0, 1, 1], [], []>} : vector<16x256xbf16>, vector<256x128xbf16>, vector<16x128xf32> -> vector<16x128xf32>
    %65 = arith.addf %64, %35 : vector<16x128xf32>
    %cst_33 = arith.constant 0.000000e+00 : f32
    %66 = vector.broadcast %cst_33 : f32 to vector<16x128xf32>
    %67 = arith.subf %66, %65 : vector<16x128xf32>
    %68 = math.exp %67 : vector<16x128xf32>
    %cst_34 = arith.constant 1.000000e+00 : f32
    %69 = vector.broadcast %cst_34 : f32 to vector<16x128xf32>
    %70 = arith.addf %69, %68 : vector<16x128xf32>
    %cst_35 = arith.constant 1.000000e+00 : f32
    %71 = vector.broadcast %cst_35 : f32 to vector<16x128xf32>
    %72 = arith.divf %71, %70 : vector<16x128xf32>
    %73 = arith.mulf %65, %72 : vector<16x128xf32>
    %74 = arith.truncf %73 : vector<16x128xf32> to vector<16x128xbf16>
    %c0_36 = arith.constant 0 : index
    %c0_37 = arith.constant 0 : index
    %75 = vector.load %arg12[%c0_36, %c0_37] : memref<128x384xbf16, #tpu.memory_space<vmem>>, vector<128x384xbf16>
    %cst_38 = arith.constant dense<0.000000e+00> : vector<16x384xf32>
    %76 = tpu.matmul %74, %75, %cst_38 {dimension_numbers = #tpu.dot_dimension_numbers<[1], [0], [0], [1], [0, 0, 1, 1], [], []>} : vector<16x128xbf16>, vector<128x384xbf16>, vector<16x384xf32> -> vector<16x384xf32>
    %77 = arith.addf %76, %38 : vector<16x384xf32>
    %78 = vector.extract_strided_slice %77 {offsets = [0, 0], sizes = [16, 128], strides = [1, 1]} : vector<16x384xf32> to vector<16x128xf32>
    %79 = vector.extract_strided_slice %77 {offsets = [0, 128], sizes = [16, 128], strides = [1, 1]} : vector<16x384xf32> to vector<16x128xf32>
    %80 = vector.extract_strided_slice %77 {offsets = [0, 256], sizes = [16, 128], strides = [1, 1]} : vector<16x384xf32> to vector<16x128xf32>
    %81 = arith.mulf %47, %50 : vector<16x128xf32>
    %82 = arith.mulf %48, %51 : vector<16x128xf32>
    %83 = arith.addf %81, %82 : vector<16x128xf32>
    %84 = arith.mulf %49, %52 : vector<16x128xf32>
    %85 = arith.addf %83, %84 : vector<16x128xf32>
    %86 = arith.mulf %79, %85 : vector<16x128xf32>
    %87 = arith.addf %40, %86 : vector<16x128xf32>
    %88 = arith.addf %87, %80 : vector<16x128xf32>
    %89 = arith.mulf %78, %47 : vector<16x128xf32>
    %90 = arith.mulf %78, %48 : vector<16x128xf32>
    %91 = arith.mulf %78, %49 : vector<16x128xf32>
    %92 = tpu.concatenate %89, %90, %91 in 0 : vector<16x128xf32>, vector<16x128xf32>, vector<16x128xf32> -> vector<48x128xf32>
    %93 = arith.addf %41, %92 : vector<48x128xf32>
    %94 = arith.addf %88, %30 : vector<16x128xf32>
    %95 = arith.addf %93, %32 : vector<48x128xf32>
    %96 = arith.truncf %95 : vector<48x128xf32> to vector<48x128xbf16>
    %c0_39 = arith.constant 0 : index
    %c0_40 = arith.constant 0 : index
    %97 = vector.load %arg9[%c0_39, %c0_40] : memref<128x256xbf16, #tpu.memory_space<vmem>>, vector<128x256xbf16>
    %cst_41 = arith.constant dense<0.000000e+00> : vector<48x256xf32>
    %98 = tpu.matmul %96, %97, %cst_41 {dimension_numbers = #tpu.dot_dimension_numbers<[1], [0], [0], [1], [0, 0, 1, 1], [], []>} : vector<48x128xbf16>, vector<128x256xbf16>, vector<48x256xf32> -> vector<48x256xf32>
    %99 = vector.extract_strided_slice %98 {offsets = [0, 0], sizes = [48, 128], strides = [1, 1]} : vector<48x256xf32> to vector<48x128xf32>
    %100 = vector.extract_strided_slice %98 {offsets = [0, 128], sizes = [48, 128], strides = [1, 1]} : vector<48x256xf32> to vector<48x128xf32>
    %101 = vector.extract_strided_slice %99 {offsets = [0, 0], sizes = [16, 128], strides = [1, 1]} : vector<48x128xf32> to vector<16x128xf32>
    %102 = vector.extract_strided_slice %99 {offsets = [16, 0], sizes = [16, 128], strides = [1, 1]} : vector<48x128xf32> to vector<16x128xf32>
    %103 = vector.extract_strided_slice %99 {offsets = [32, 0], sizes = [16, 128], strides = [1, 1]} : vector<48x128xf32> to vector<16x128xf32>
    %104 = vector.extract_strided_slice %100 {offsets = [0, 0], sizes = [16, 128], strides = [1, 1]} : vector<48x128xf32> to vector<16x128xf32>
    %105 = vector.extract_strided_slice %100 {offsets = [16, 0], sizes = [16, 128], strides = [1, 1]} : vector<48x128xf32> to vector<16x128xf32>
    %106 = vector.extract_strided_slice %100 {offsets = [32, 0], sizes = [16, 128], strides = [1, 1]} : vector<48x128xf32> to vector<16x128xf32>
    %107 = arith.mulf %104, %104 : vector<16x128xf32>
    %108 = arith.mulf %105, %105 : vector<16x128xf32>
    %109 = arith.addf %107, %108 : vector<16x128xf32>
    %110 = arith.mulf %106, %106 : vector<16x128xf32>
    %111 = arith.addf %109, %110 : vector<16x128xf32>
    %cst_42 = arith.constant 9.99999993E-9 : f32
    %112 = vector.broadcast %cst_42 : f32 to vector<16x128xf32>
    %113 = arith.addf %111, %112 : vector<16x128xf32>
    %114 = math.sqrt %113 : vector<16x128xf32>
    %115 = tpu.concatenate %94, %114 in 1 : vector<16x128xf32>, vector<16x128xf32> -> vector<16x256xf32>
    %116 = arith.truncf %115 : vector<16x256xf32> to vector<16x256xbf16>
    %c0_43 = arith.constant 0 : index
    %c0_44 = arith.constant 0 : index
    %117 = vector.load %arg10[%c0_43, %c0_44] : memref<256x128xbf16, #tpu.memory_space<vmem>>, vector<256x128xbf16>
    %cst_45 = arith.constant dense<0.000000e+00> : vector<16x128xf32>
    %118 = tpu.matmul %116, %117, %cst_45 {dimension_numbers = #tpu.dot_dimension_numbers<[1], [0], [0], [1], [0, 0, 1, 1], [], []>} : vector<16x256xbf16>, vector<256x128xbf16>, vector<16x128xf32> -> vector<16x128xf32>
    %119 = arith.addf %118, %35 : vector<16x128xf32>
    %cst_46 = arith.constant 0.000000e+00 : f32
    %120 = vector.broadcast %cst_46 : f32 to vector<16x128xf32>
    %121 = arith.subf %120, %119 : vector<16x128xf32>
    %122 = math.exp %121 : vector<16x128xf32>
    %cst_47 = arith.constant 1.000000e+00 : f32
    %123 = vector.broadcast %cst_47 : f32 to vector<16x128xf32>
    %124 = arith.addf %123, %122 : vector<16x128xf32>
    %cst_48 = arith.constant 1.000000e+00 : f32
    %125 = vector.broadcast %cst_48 : f32 to vector<16x128xf32>
    %126 = arith.divf %125, %124 : vector<16x128xf32>
    %127 = arith.mulf %119, %126 : vector<16x128xf32>
    %128 = arith.truncf %127 : vector<16x128xf32> to vector<16x128xbf16>
    %c0_49 = arith.constant 0 : index
    %c0_50 = arith.constant 0 : index
    %129 = vector.load %arg12[%c0_49, %c0_50] : memref<128x384xbf16, #tpu.memory_space<vmem>>, vector<128x384xbf16>
    %cst_51 = arith.constant dense<0.000000e+00> : vector<16x384xf32>
    %130 = tpu.matmul %128, %129, %cst_51 {dimension_numbers = #tpu.dot_dimension_numbers<[1], [0], [0], [1], [0, 0, 1, 1], [], []>} : vector<16x128xbf16>, vector<128x384xbf16>, vector<16x384xf32> -> vector<16x384xf32>
    %131 = arith.addf %130, %38 : vector<16x384xf32>
    %132 = vector.extract_strided_slice %131 {offsets = [0, 0], sizes = [16, 128], strides = [1, 1]} : vector<16x384xf32> to vector<16x128xf32>
    %133 = vector.extract_strided_slice %131 {offsets = [0, 128], sizes = [16, 128], strides = [1, 1]} : vector<16x384xf32> to vector<16x128xf32>
    %134 = vector.extract_strided_slice %131 {offsets = [0, 256], sizes = [16, 128], strides = [1, 1]} : vector<16x384xf32> to vector<16x128xf32>
    %135 = arith.mulf %101, %104 : vector<16x128xf32>
    %136 = arith.mulf %102, %105 : vector<16x128xf32>
    %137 = arith.addf %135, %136 : vector<16x128xf32>
    %138 = arith.mulf %103, %106 : vector<16x128xf32>
    %139 = arith.addf %137, %138 : vector<16x128xf32>
    %140 = arith.mulf %133, %139 : vector<16x128xf32>
    %141 = arith.addf %94, %140 : vector<16x128xf32>
    %142 = arith.addf %141, %134 : vector<16x128xf32>
    %143 = arith.mulf %132, %101 : vector<16x128xf32>
    %144 = arith.mulf %132, %102 : vector<16x128xf32>
    %145 = arith.mulf %132, %103 : vector<16x128xf32>
    %146 = tpu.concatenate %143, %144, %145 in 0 : vector<16x128xf32>, vector<16x128xf32>, vector<16x128xf32> -> vector<48x128xf32>
    %147 = arith.addf %95, %146 : vector<48x128xf32>
    %148 = arith.addf %142, %30 : vector<16x128xf32>
    %149 = arith.addf %147, %32 : vector<48x128xf32>
    %150 = arith.truncf %149 : vector<48x128xf32> to vector<48x128xbf16>
    %c0_52 = arith.constant 0 : index
    %c0_53 = arith.constant 0 : index
    %151 = vector.load %arg9[%c0_52, %c0_53] : memref<128x256xbf16, #tpu.memory_space<vmem>>, vector<128x256xbf16>
    %cst_54 = arith.constant dense<0.000000e+00> : vector<48x256xf32>
    %152 = tpu.matmul %150, %151, %cst_54 {dimension_numbers = #tpu.dot_dimension_numbers<[1], [0], [0], [1], [0, 0, 1, 1], [], []>} : vector<48x128xbf16>, vector<128x256xbf16>, vector<48x256xf32> -> vector<48x256xf32>
    %153 = vector.extract_strided_slice %152 {offsets = [0, 0], sizes = [48, 128], strides = [1, 1]} : vector<48x256xf32> to vector<48x128xf32>
    %154 = vector.extract_strided_slice %152 {offsets = [0, 128], sizes = [48, 128], strides = [1, 1]} : vector<48x256xf32> to vector<48x128xf32>
    %155 = vector.extract_strided_slice %153 {offsets = [0, 0], sizes = [16, 128], strides = [1, 1]} : vector<48x128xf32> to vector<16x128xf32>
    %156 = vector.extract_strided_slice %153 {offsets = [16, 0], sizes = [16, 128], strides = [1, 1]} : vector<48x128xf32> to vector<16x128xf32>
    %157 = vector.extract_strided_slice %153 {offsets = [32, 0], sizes = [16, 128], strides = [1, 1]} : vector<48x128xf32> to vector<16x128xf32>
    %158 = vector.extract_strided_slice %154 {offsets = [0, 0], sizes = [16, 128], strides = [1, 1]} : vector<48x128xf32> to vector<16x128xf32>
    %159 = vector.extract_strided_slice %154 {offsets = [16, 0], sizes = [16, 128], strides = [1, 1]} : vector<48x128xf32> to vector<16x128xf32>
    %160 = vector.extract_strided_slice %154 {offsets = [32, 0], sizes = [16, 128], strides = [1, 1]} : vector<48x128xf32> to vector<16x128xf32>
    %161 = arith.mulf %158, %158 : vector<16x128xf32>
    %162 = arith.mulf %159, %159 : vector<16x128xf32>
    %163 = arith.addf %161, %162 : vector<16x128xf32>
    %164 = arith.mulf %160, %160 : vector<16x128xf32>
    %165 = arith.addf %163, %164 : vector<16x128xf32>
    %cst_55 = arith.constant 9.99999993E-9 : f32
    %166 = vector.broadcast %cst_55 : f32 to vector<16x128xf32>
    %167 = arith.addf %165, %166 : vector<16x128xf32>
    %168 = math.sqrt %167 : vector<16x128xf32>
    %169 = tpu.concatenate %148, %168 in 1 : vector<16x128xf32>, vector<16x128xf32> -> vector<16x256xf32>
    %170 = arith.truncf %169 : vector<16x256xf32> to vector<16x256xbf16>
    %c0_56 = arith.constant 0 : index
    %c0_57 = arith.constant 0 : index
    %171 = vector.load %arg10[%c0_56, %c0_57] : memref<256x128xbf16, #tpu.memory_space<vmem>>, vector<256x128xbf16>
    %cst_58 = arith.constant dense<0.000000e+00> : vector<16x128xf32>
    %172 = tpu.matmul %170, %171, %cst_58 {dimension_numbers = #tpu.dot_dimension_numbers<[1], [0], [0], [1], [0, 0, 1, 1], [], []>} : vector<16x256xbf16>, vector<256x128xbf16>, vector<16x128xf32> -> vector<16x128xf32>
    %173 = arith.addf %172, %35 : vector<16x128xf32>
    %cst_59 = arith.constant 0.000000e+00 : f32
    %174 = vector.broadcast %cst_59 : f32 to vector<16x128xf32>
    %175 = arith.subf %174, %173 : vector<16x128xf32>
    %176 = math.exp %175 : vector<16x128xf32>
    %cst_60 = arith.constant 1.000000e+00 : f32
    %177 = vector.broadcast %cst_60 : f32 to vector<16x128xf32>
    %178 = arith.addf %177, %176 : vector<16x128xf32>
    %cst_61 = arith.constant 1.000000e+00 : f32
    %179 = vector.broadcast %cst_61 : f32 to vector<16x128xf32>
    %180 = arith.divf %179, %178 : vector<16x128xf32>
    %181 = arith.mulf %173, %180 : vector<16x128xf32>
    %182 = arith.truncf %181 : vector<16x128xf32> to vector<16x128xbf16>
    %c0_62 = arith.constant 0 : index
    %c0_63 = arith.constant 0 : index
    %183 = vector.load %arg12[%c0_62, %c0_63] : memref<128x384xbf16, #tpu.memory_space<vmem>>, vector<128x384xbf16>
    %cst_64 = arith.constant dense<0.000000e+00> : vector<16x384xf32>
    %184 = tpu.matmul %182, %183, %cst_64 {dimension_numbers = #tpu.dot_dimension_numbers<[1], [0], [0], [1], [0, 0, 1, 1], [], []>} : vector<16x128xbf16>, vector<128x384xbf16>, vector<16x384xf32> -> vector<16x384xf32>
    %185 = arith.addf %184, %38 : vector<16x384xf32>
    %186 = vector.extract_strided_slice %185 {offsets = [0, 128], sizes = [16, 128], strides = [1, 1]} : vector<16x384xf32> to vector<16x128xf32>
    %187 = vector.extract_strided_slice %185 {offsets = [0, 256], sizes = [16, 128], strides = [1, 1]} : vector<16x384xf32> to vector<16x128xf32>
    %188 = arith.mulf %155, %158 : vector<16x128xf32>
    %189 = arith.mulf %156, %159 : vector<16x128xf32>
    %190 = arith.addf %188, %189 : vector<16x128xf32>
    %191 = arith.mulf %157, %160 : vector<16x128xf32>
    %192 = arith.addf %190, %191 : vector<16x128xf32>
    %193 = arith.mulf %186, %192 : vector<16x128xf32>
    %194 = arith.addf %148, %193 : vector<16x128xf32>
    %195 = arith.addf %194, %187 : vector<16x128xf32>
    %196 = arith.truncf %195 : vector<16x128xf32> to vector<16x128xbf16>
    %c0_65 = arith.constant 0 : index
    %c0_66 = arith.constant 0 : index
    %197 = vector.load %arg14[%c0_65, %c0_66] : memref<128x64xbf16, #tpu.memory_space<vmem>>, vector<128x64xbf16>
    %cst_67 = arith.constant dense<0.000000e+00> : vector<16x64xf32>
    %198 = tpu.matmul %196, %197, %cst_67 {dimension_numbers = #tpu.dot_dimension_numbers<[1], [0], [0], [1], [0, 0, 1, 1], [], []>} : vector<16x128xbf16>, vector<128x64xbf16>, vector<16x64xf32> -> vector<16x64xf32>
    %c0_68 = arith.constant 0 : index
    %c0_69 = arith.constant 0 : index
    %199 = vector.load %arg15[%c0_68, %c0_69] : memref<1x64xf32, #tpu.memory_space<vmem>>, vector<1x64xf32>
    %200 = vector.broadcast %199 : vector<1x64xf32> to vector<16x64xf32>
    %201 = arith.addf %198, %200 : vector<16x64xf32>
    %cst_70 = arith.constant 0.000000e+00 : f32
    %202 = vector.broadcast %cst_70 : f32 to vector<16x64xf32>
    %203 = arith.subf %202, %201 : vector<16x64xf32>
    %204 = math.exp %203 : vector<16x64xf32>
    %cst_71 = arith.constant 1.000000e+00 : f32
    %205 = vector.broadcast %cst_71 : f32 to vector<16x64xf32>
    %206 = arith.addf %205, %204 : vector<16x64xf32>
    %cst_72 = arith.constant 1.000000e+00 : f32
    %207 = vector.broadcast %cst_72 : f32 to vector<16x64xf32>
    %208 = arith.divf %207, %206 : vector<16x64xf32>
    %209 = arith.mulf %201, %208 : vector<16x64xf32>
    %c0_73 = arith.constant 0 : index
    %c0_74 = arith.constant 0 : index
    %210 = vector.load %arg16[%c0_73, %c0_74] : memref<1x64xf32, #tpu.memory_space<vmem>>, vector<1x64xf32>
    %211 = vector.broadcast %210 : vector<1x64xf32> to vector<16x64xf32>
    %212 = arith.mulf %209, %211 : vector<16x64xf32>
    %cst_75 = arith.constant dense<0.000000e+00> : vector<16xf32>
    %213 = vector.multi_reduction <add>, %212, %cst_75 [1] : vector<16x64xf32> to vector<16xf32>
    %214 = vector.shape_cast %213 : vector<16xf32> to vector<16x1xf32>
    %c0_76 = arith.constant 0 : index
    %c0_77 = arith.constant 0 : index
    %215 = vector.load %arg17[%c0_76, %c0_77] : memref<1x1xf32, #tpu.memory_space<vmem>>, vector<1x1xf32>
    %216 = vector.broadcast %215 : vector<1x1xf32> to vector<16x1xf32>
    %217 = arith.addf %214, %216 : vector<16x1xf32>
    %c0_78 = arith.constant 0 : index
    %c0_79 = arith.constant 0 : index
    %218 = vector.load %arg18[%c0_78, %c0_79] : memref<16x1xf32, #tpu.memory_space<vmem>>, vector<16x1xf32>
    tpu.vector_store %arg18[%c0_78, %c0_79], %217 {strides = array<i32>} : memref<16x1xf32, #tpu.memory_space<vmem>>, vector<16x1xf32>,
    return
  }
  func.func @transform_0(%arg0: i32) -> (i32, i32) {
    %c0_i32 = arith.constant 0 : i32
    %c0_i32_0 = arith.constant 0 : i32
    %c0_i32_1 = arith.constant 0 : i32
    return %c0_i32, %c0_i32_0 : i32, i32
  }
  func.func @transform_1(%arg0: i32) -> (i32, i32) {
    %c0_i32 = arith.constant 0 : i32
    %c0_i32_0 = arith.constant 0 : i32
    %c0_i32_1 = arith.constant 0 : i32
    return %c0_i32, %c0_i32_0 : i32, i32
  }
  func.func @transform_2(%arg0: i32) -> (i32, i32) {
    %c0_i32 = arith.constant 0 : i32
    %c0_i32_0 = arith.constant 0 : i32
    %c0_i32_1 = arith.constant 0 : i32
    return %c0_i32, %c0_i32_0 : i32, i32
  }
  func.func @transform_3(%arg0: i32) -> (i32, i32) {
    %c0_i32 = arith.constant 0 : i32
    %c0_i32_0 = arith.constant 0 : i32
    %c0_i32_1 = arith.constant 0 : i32
    return %c0_i32, %c0_i32_0 : i32, i32
  }
  func.func @transform_4(%arg0: i32) -> (i32, i32) {
    %c0_i32 = arith.constant 0 : i32
    %c0_i32_0 = arith.constant 0 : i32
    %c0_i32_1 = arith.constant 0 : i32
    return %c0_i32, %c0_i32_0 : i32, i32
  }
  func.func @transform_5(%arg0: i32) -> (i32, i32) {
    %c0_i32 = arith.constant 0 : i32
    %c0_i32_0 = arith.constant 0 : i32
    %c0_i32_1 = arith.constant 0 : i32
    return %c0_i32, %c0_i32_0 : i32, i32
  }
  func.func @transform_6(%arg0: i32) -> (i32, i32) {
    %c0_i32 = arith.constant 0 : i32
    %c0_i32_0 = arith.constant 0 : i32
    %c0_i32_1 = arith.constant 0 : i32
    return %c0_i32, %c0_i32_0 : i32, i32
  }
  func.func @transform_7(%arg0: i32) -> (i32, i32) {
    %c0_i32 = arith.constant 0 : i32
    %c0_i32_0 = arith.constant 0 : i32
    %c0_i32_1 = arith.constant 0 : i32
    return %c0_i32, %c0_i32_0 : i32, i32
  }
  func.func @transform_8(%arg0: i32) -> (i32, i32) {
    %c0_i32 = arith.constant 0 : i32
    %c0_i32_0 = arith.constant 0 : i32
    %c0_i32_1 = arith.constant 0 : i32
    return %c0_i32, %c0_i32_0 : i32, i32
  }
  func.func @transform_9(%arg0: i32) -> (i32, i32) {
    %c0_i32 = arith.constant 0 : i32
    %c0_i32_0 = arith.constant 0 : i32
    %c0_i32_1 = arith.constant 0 : i32
    return %c0_i32, %c0_i32_0 : i32, i32
  }
  func.func @transform_10(%arg0: i32) -> (i32, i32) {
    %c0_i32 = arith.constant 0 : i32
    %c0_i32_0 = arith.constant 0 : i32
    %c0_i32_1 = arith.constant 0 : i32
    return %c0_i32, %c0_i32_0 : i32, i32
  }
  func.func @transform_11(%arg0: i32) -> (i32, i32) {
    %c0_i32 = arith.constant 0 : i32
    %c0_i32_0 = arith.constant 0 : i32
    %c0_i32_1 = arith.constant 0 : i32
    return %c0_i32, %c0_i32_0 : i32, i32
  }
  func.func @transform_12(%arg0: i32) -> (i32, i32) {
    %c0_i32 = arith.constant 0 : i32
    %c0_i32_0 = arith.constant 0 : i32
    %c0_i32_1 = arith.constant 0 : i32
    return %c0_i32, %c0_i32_0 : i32, i32
  }
  func.func @transform_13(%arg0: i32) -> (i32, i32) {
    %c0_i32 = arith.constant 0 : i32
    %c0_i32_0 = arith.constant 0 : i32
    %c0_i32_1 = arith.constant 0 : i32
    return %c0_i32, %c0_i32_0 : i32, i32
  }
  func.func @transform_14(%arg0: i32) -> (i32, i32) {
    %c0_i32 = arith.constant 0 : i32
    %c0_i32_0 = arith.constant 0 : i32
    %c0_i32_1 = arith.constant 0 : i32
    return %c0_i32, %c0_i32_0 : i32, i32
  }
  func.func @transform_15(%arg0: i32) -> (i32, i32) {
    %c0_i32 = arith.constant 0 : i32
    %c0_i32_0 = arith.constant 0 : i32
    %c0_i32_1 = arith.constant 0 : i32
    return %c0_i32, %c0_i32_0 : i32, i32
  }
  func.func @transform_16(%arg0: i32) -> (i32, i32) {
    %c0_i32 = arith.constant 0 : i32
    %c0_i32_0 = arith.constant 0 : i32
    %c0_i32_1 = arith.constant 0 : i32
    return %c0_i32, %c0_i32_0 : i32, i32
  }
  func.func @transform_17(%arg0: i32) -> (i32, i32) {
    %c0_i32 = arith.constant 0 : i32
    %c0_i32_0 = arith.constant 0 : i32
    %c0_i32_1 = arith.constant 0 : i32
    return %c0_i32, %c0_i32_0 : i32, i32
  }
}

</mosaic_0001>

<llo_original>
// kernel: painn_forward.1
$region0: #{painn_forward.1}
  #allocation0 [shape = 'u32[]', space=smem, size = 0x4, offset = 0x4, fixed_abs, tag = 'smem constant byte address 0x4 - core index']
  #allocation1 [shape = 'u32[144,128]{1,0:T(1,128)}', space=vmem, size = 0x12000, scoped, tag = 'internal scratch']
  #allocation2 [shape = 'f32[1,1]{1,0:T(1,128)S(1)}', space=vmem, size = 0x200, scoped, tag = 'scoped memory for painn_forward.1']
  %s0 = inlined_call_operand.vmem [shape: f32[16,128], index: 0, kind: input, shape index: {}]
  %s1 = inlined_call_operand.vmem [shape: bf16[16,384], index: 1, kind: input, shape index: {}]
  %s2 = inlined_call_operand.vmem [shape: bf16[48,384], index: 2, kind: input, shape index: {}]
  %s3 = inlined_call_operand.vmem [shape: f32[384,256], index: 3, kind: input, shape index: {}]
  %s4 = inlined_call_operand.vmem [shape: bf16[128,128], index: 4, kind: input, shape index: {}]
  %s5 = inlined_call_operand.vmem [shape: f32[1,128], index: 5, kind: input, shape index: {}]
  %s6 = inlined_call_operand.vmem [shape: bf16[128,256], index: 6, kind: input, shape index: {}]
  %s7 = inlined_call_operand.vmem [shape: f32[1,256], index: 7, kind: input, shape index: {}]
  %s8 = inlined_call_operand.vmem [shape: bf16[128,256], index: 8, kind: input, shape index: {}]
  %s9 = inlined_call_operand.vmem [shape: bf16[256,128], index: 9, kind: input, shape index: {}]
  %s10 = inlined_call_operand.vmem [shape: f32[1,128], index: 10, kind: input, shape index: {}]
  %s11 = inlined_call_operand.vmem [shape: bf16[128,384], index: 11, kind: input, shape index: {}]
  %s12 = inlined_call_operand.vmem [shape: f32[1,384], index: 12, kind: input, shape index: {}]
  %s13 = inlined_call_operand.vmem [shape: bf16[128,64], index: 13, kind: input, shape index: {}]
  %s14 = inlined_call_operand.vmem [shape: f32[1,64], index: 14, kind: input, shape index: {}]
  %s15 = inlined_call_operand.vmem [shape: f32[1,64], index: 15, kind: input, shape index: {}]
  %s16 = inlined_call_operand.<no memory space> [shape: f32[1,1], index: 16, kind: input, shape index: {}]
  %s17 = inlined_call_operand.vmem [shape: f32[16,1], index: 17, kind: output, shape index: {}]
  %s18 = sld [smem:[#allocation0]]
  $region78: #{painn_forward.1} parent=0
    _
  %s20 = ssub.s32 1, %s18
  %s21 = scalar_select 0, %s20, %s18
  %v22 = vstv %s16
  %23 = vst [vmem:[#allocation2] sm:$0x1] %v22
  // Predicated region
  $region2: #{painn_forward.1} parent=0 // pred_check
    _
  $region3: #{painn_forward.1} parent=0 // pred_check_branch
    %25 = sbr.rel (0) target = $region5
  $region4: #{painn_forward.1} parent=0 // pred_region
    _
  $region5: #{painn_forward.1} parent=0 // pred_fallthru
    _
  // Predicated region
  $region6: #{painn_forward.1} parent=0 // pred_check
    _
  $region7: #{painn_forward.1} parent=0 // pred_check_branch
    %27 = sbr.rel (0) target = $region9
  $region8: #{painn_forward.1} parent=0 // pred_region
    _
  $region9: #{painn_forward.1} parent=0 // pred_fallthru
    _
  // Predicated region
  $region10: #{painn_forward.1} parent=0 // pred_check
    _
  $region11: #{painn_forward.1} parent=0 // pred_check_branch
    %29 = sbr.rel (0) target = $region13
  $region12: #{painn_forward.1} parent=0 // pred_region
    _
  $region13: #{painn_forward.1} parent=0 // pred_fallthru
    _
  // Predicated region
  $region14: #{painn_forward.1} parent=0 // pred_check
    _
  $region15: #{painn_forward.1} parent=0 // pred_check_branch
    %31 = sbr.rel (0) target = $region17
  $region16: #{painn_forward.1} parent=0 // pred_region
    _
  $region17: #{painn_forward.1} parent=0 // pred_fallthru
    _
  // Predicated region
  $region18: #{painn_forward.1} parent=0 // pred_check
    _
  $region19: #{painn_forward.1} parent=0 // pred_check_branch
    %33 = sbr.rel (0) target = $region21
  $region20: #{painn_forward.1} parent=0 // pred_region
    _
  $region21: #{painn_forward.1} parent=0 // pred_fallthru
    _
  // Predicated region
  $region22: #{painn_forward.1} parent=0 // pred_check
    _
  $region23: #{painn_forward.1} parent=0 // pred_check_branch
    %35 = sbr.rel (0) target = $region25
  $region24: #{painn_forward.1} parent=0 // pred_region
    _
  $region25: #{painn_forward.1} parent=0 // pred_fallthru
    _
  // Predicated region
  $region26: #{painn_forward.1} parent=0 // pred_check
    _
  $region27: #{painn_forward.1} parent=0 // pred_check_branch
    %37 = sbr.rel (0) target = $region29
  $region28: #{painn_forward.1} parent=0 // pred_region
    _
  $region29: #{painn_forward.1} parent=0 // pred_fallthru
    _
  // Predicated region
  $region30: #{painn_forward.1} parent=0 // pred_check
    _
  $region31: #{painn_forward.1} parent=0 // pred_check_branch
    %39 = sbr.rel (0) target = $region33
  $region32: #{painn_forward.1} parent=0 // pred_region
    _
  $region33: #{painn_forward.1} parent=0 // pred_fallthru
    _
  // Predicated region
  $region34: #{painn_forward.1} parent=0 // pred_check
    _
  $region35: #{painn_forward.1} parent=0 // pred_check_branch
    %41 = sbr.rel (0) target = $region37
  $region36: #{painn_forward.1} parent=0 // pred_region
    _
  $region37: #{painn_forward.1} parent=0 // pred_fallthru
    _
  // Predicated region
  $region38: #{painn_forward.1} parent=0 // pred_check
    _
  $region39: #{painn_forward.1} parent=0 // pred_check_branch
    %43 = sbr.rel (0) target = $region41
  $region40: #{painn_forward.1} parent=0 // pred_region
    _
  $region41: #{painn_forward.1} parent=0 // pred_fallthru
    _
  // Predicated region
  $region42: #{painn_forward.1} parent=0 // pred_check
    _
  $region43: #{painn_forward.1} parent=0 // pred_check_branch
    %45 = sbr.rel (0) target = $region45
  $region44: #{painn_forward.1} parent=0 // pred_region
    _
  $region45: #{painn_forward.1} parent=0 // pred_fallthru
    _
  // Predicated region
  $region46: #{painn_forward.1} parent=0 // pred_check
    _
  $region47: #{painn_forward.1} parent=0 // pred_check_branch
    %47 = sbr.rel (0) target = $region49
  $region48: #{painn_forward.1} parent=0 // pred_region
    _
  $region49: #{painn_forward.1} parent=0 // pred_fallthru
    _
  // Predicated region
  $region50: #{painn_forward.1} parent=0 // pred_check
    _
  $region51: #{painn_forward.1} parent=0 // pred_check_branch
    %49 = sbr.rel (0) target = $region53
  $region52: #{painn_forward.1} parent=0 // pred_region
    _
  $region53: #{painn_forward.1} parent=0 // pred_fallthru
    _
  // Predicated region
  $region54: #{painn_forward.1} parent=0 // pred_check
    _
  $region55: #{painn_forward.1} parent=0 // pred_check_branch
    %51 = sbr.rel (0) target = $region57
  $region56: #{painn_forward.1} parent=0 // pred_region
    _
  $region57: #{painn_forward.1} parent=0 // pred_fallthru
    _
  // Predicated region
  $region58: #{painn_forward.1} parent=0 // pred_check
    _
  $region59: #{painn_forward.1} parent=0 // pred_check_branch
    %53 = sbr.rel (0) target = $region61
  $region60: #{painn_forward.1} parent=0 // pred_region
    _
  $region61: #{painn_forward.1} parent=0 // pred_fallthru
    _
  // Predicated region
  $region62: #{painn_forward.1} parent=0 // pred_check
    _
  $region63: #{painn_forward.1} parent=0 // pred_check_branch
    %55 = sbr.rel (0) target = $region65
  $region64: #{painn_forward.1} parent=0 // pred_region
    _
  $region65: #{painn_forward.1} parent=0 // pred_fallthru
    _
  // Predicated region
  $region66: #{painn_forward.1} parent=0 // pred_check
    _
  $region67: #{painn_forward.1} parent=0 // pred_check_branch
    %57 = sbr.rel (0) target = $region69
  $region68: #{painn_forward.1} parent=0 // pred_region
    _
  $region69: #{painn_forward.1} parent=0 // pred_fallthru
    _
  %v59 = vld [vmem:[%s0] sm:$0xff]
  %v60 = vld [vmem:[%s0 + $0x8] sm:$0xff]
  %v61 = vpack.c.bf16 %v60, %v59
  %v62 = vld [vmem:[%s4] sm:$0xf]
  %v63 = vld [vmem:[%s4 + $0x4] sm:$0xf]
  %v64 = vld [vmem:[%s4 + $0x8] sm:$0xf]
  %v65 = vld [vmem:[%s4 + $0xc] sm:$0xf]
  %v66 = vld [vmem:[%s4 + $0x10] sm:$0xf]
  %v67 = vld [vmem:[%s4 + $0x14] sm:$0xf]
  %v68 = vld [vmem:[%s4 + $0x18] sm:$0xf]
  %v69 = vld [vmem:[%s4 + $0x1c] sm:$0xf]
  %v70 = vld [vmem:[%s4 + $0x20] sm:$0xf]
  %v71 = vld [vmem:[%s4 + $0x24] sm:$0xf]
  %v72 = vld [vmem:[%s4 + $0x28] sm:$0xf]
  %v73 = vld [vmem:[%s4 + $0x2c] sm:$0xf]
  %v74 = vld [vmem:[%s4 + $0x30] sm:$0xf]
  %v75 = vld [vmem:[%s4 + $0x34] sm:$0xf]
  %v76 = vld [vmem:[%s4 + $0x38] sm:$0xf]
  %v77 = vld [vmem:[%s4 + $0x3c] sm:$0xf]
  %v78 = vld [vmem:[%s5] sm:$0x1]
  %v80 = vlaneseq
  %v81 = vshrl.u32 %v80, 7
  %v82 = vsub.s32 0, %v81
  %v83 = vrot.slane %v78, %v82
  %v101 = vunpack.c.l.b16 %v62
  %v102 = vunpack.c.l.b16 %v63
  %v103 = vunpack.c.l.b16 %v64
  %v104 = vunpack.c.l.b16 %v65
  %v105 = vunpack.c.l.b16 %v66
  %v106 = vunpack.c.l.b16 %v67
  %v107 = vunpack.c.l.b16 %v68
  %v108 = vunpack.c.l.b16 %v69
  %v109 = vunpack.c.l.b16 %v70
  %v110 = vunpack.c.l.b16 %v71
  %v111 = vunpack.c.l.b16 %v72
  %v112 = vunpack.c.l.b16 %v73
  %v113 = vunpack.c.l.b16 %v74
  %v114 = vunpack.c.l.b16 %v75
  %v115 = vunpack.c.l.b16 %v76
  %v116 = vunpack.c.l.b16 %v77
  %v117 = vpack.c.b16 %v102, %v101
  %v118 = vpack.c.b16 %v104, %v103
  %v119 = vpack.c.b16 %v106, %v105
  %v120 = vpack.c.b16 %v108, %v107
  %v121 = vpack.c.b16 %v110, %v109
  %v122 = vpack.c.b16 %v112, %v111
  %v123 = vpack.c.b16 %v114, %v113
  %v124 = vpack.c.b16 %v116, %v115
  %133 = vmatprep.subr.bf16.mxu0 0
  %134 = vmatpush1.bf16.msra.mxu0 %v117
  %135 = vmatprep.subr.bf16.mxu0 0
  %136 = vmatpush1.bf16.msra.mxu0 %v118
  %137 = vmatprep.subr.bf16.mxu0 0
  %138 = vmatpush1.bf16.msra.mxu0 %v119
  %139 = vmatprep.subr.bf16.mxu0 0
  %140 = vmatpush1.bf16.msra.mxu0 %v120
  %141 = vmatprep.subr.bf16.mxu0 0
  %142 = vmatpush1.bf16.msra.mxu0 %v121
  %143 = vmatprep.subr.bf16.mxu0 0
  %144 = vmatpush1.bf16.msra.mxu0 %v122
  %145 = vmatprep.subr.bf16.mxu0 0
  %146 = vmatpush1.bf16.msra.mxu0 %v123
  %147 = vmatprep.subr.bf16.mxu0 0
  %148 = vmatpush1.bf16.msra.mxu0 %v124
  %149 = vmatprep.subr.bf16.mxu0 0
  %150 = vmatpush1.bf16.msra.mxu0 0
  %151 = vmatprep.subr.bf16.mxu0 0
  %152 = vmatpush1.bf16.msra.mxu0 0
  %153 = vmatprep.subr.bf16.mxu0 0
  %154 = vmatpush1.bf16.msra.mxu0 0
  %155 = vmatprep.subr.bf16.mxu0 0
  %156 = vmatpush1.bf16.msra.mxu0 0
  %157 = vmatprep.subr.bf16.mxu0 0
  %158 = vmatpush1.bf16.msra.mxu0 0
  %159 = vmatprep.subr.bf16.mxu0 0
  %160 = vmatpush1.bf16.msra.mxu0 0
  %161 = vmatprep.subr.bf16.mxu0 0
  %162 = vmatpush1.bf16.msra.mxu0 0
  %163 = vmatprep.subr.bf16.mxu0 0
  %164 = vmatpush1.bf16.msra.mxu0 0
  %165 = vmatprep.mubr.bf16.mxu0 0
  %166 = vmatmul.mubr.bf16.gmra.mrb[0].mxu0 %v61
  %v167 = vpop.f32.mrb[0].mxu0
  %v168 = vadd.f32 %v83, %v167
  %v169 = vpop.f32.mrb[0].mxu0
  %v170 = vpop.f32.mrb[0].mxu0
  %v171 = vadd.f32 %v83, %v170
  %v172 = vpop.f32.mrb[0].mxu0
  %173 = vdwg.mxu0
  %v174 = vsub.f32 0.0, %v168
  %v175 = vsub.f32 0.0, %v171
  %v176 = vmul.f32 %v174, 1.442695
  %v177 = vpow.pop %v176
  %v178 = vmul.f32 %v175, 1.442695
  %v179 = vpow.pop %v178
  %v180 = vadd.f32 %v177, 1.0
  %v181 = vadd.f32 %v179, 1.0
  %v182 = vrcp.pop %v180
  %v183 = vmul.f32 1.0, %v182
  %v184 = vrcp.pop %v181
  %v185 = vmul.f32 1.0, %v184
  %v186 = vmul.f32 %v168, %v183
  %v187 = vmul.f32 %v171, %v185
  %v188 = vpack.c.bf16 %v187, %v186
  %v189 = vld [vmem:[%s6] sm:$0xff]
  %v190 = vld [vmem:[%s6 + $0x8] sm:$0xff]
  %v191 = vld [vmem:[%s6 + $0x10] sm:$0xff]
  %v192 = vld [vmem:[%s6 + $0x18] sm:$0xff]
  %v193 = vld [vmem:[%s6 + $0x20] sm:$0xff]
  %v194 = vld [vmem:[%s6 + $0x28] sm:$0xff]
  %v195 = vld [vmem:[%s6 + $0x30] sm:$0xff]
  %v196 = vld [vmem:[%s6 + $0x38] sm:$0xff]
  %v197 = vld [vmem:[%s6 + $0x40] sm:$0xff]
  %v198 = vld [vmem:[%s6 + $0x48] sm:$0xff]
  %v199 = vld [vmem:[%s6 + $0x50] sm:$0xff]
  %v200 = vld [vmem:[%s6 + $0x58] sm:$0xff]
  %v201 = vld [vmem:[%s6 + $0x60] sm:$0xff]
  %v202 = vld [vmem:[%s6 + $0x68] sm:$0xff]
  %v203 = vld [vmem:[%s6 + $0x70] sm:$0xff]
  %v204 = vld [vmem:[%s6 + $0x78] sm:$0xff]
  %v205 = vld [vmem:[%s7] sm:$0x3]
  %v207 = vlaneseq
  %v208 = vshrl.u32 %v207, 7
  %v209 = vsub.s32 0, %v208
  %v210 = vrot.slane %v205, %v209
  %v211 = vlaneseq
  %v212 = vshrl.u32 %v211, 7
  %v213 = vsub.s32 1, %v212
  %v214 = vrot.slane %v205, %v213
  %v233 = vunpack.c.l.b16 %v189
  %v234 = vunpack.c.h.b16 %v189
  %v235 = vunpack.c.l.b16 %v190
  %v236 = vunpack.c.h.b16 %v190
  %v237 = vunpack.c.l.b16 %v191
  %v238 = vunpack.c.h.b16 %v191
  %v239 = vunpack.c.l.b16 %v192
  %v240 = vunpack.c.h.b16 %v192
  %v241 = vunpack.c.l.b16 %v193
  %v242 = vunpack.c.h.b16 %v193
  %v243 = vunpack.c.l.b16 %v194
  %v244 = vunpack.c.h.b16 %v194
  %v245 = vunpack.c.l.b16 %v195
  %v246 = vunpack.c.h.b16 %v195
  %v247 = vunpack.c.l.b16 %v196
  %v248 = vunpack.c.h.b16 %v196
  %v249 = vunpack.c.l.b16 %v197
  %v250 = vunpack.c.h.b16 %v197
  %v251 = vunpack.c.l.b16 %v198
  %v252 = vunpack.c.h.b16 %v198
  %v253 = vunpack.c.l.b16 %v199
  %v254 = vunpack.c.h.b16 %v199
  %v255 = vunpack.c.l.b16 %v200
  %v256 = vunpack.c.h.b16 %v200
  %v257 = vunpack.c.l.b16 %v201
  %v258 = vunpack.c.h.b16 %v201
  %v259 = vunpack.c.l.b16 %v202
  %v260 = vunpack.c.h.b16 %v202
  %v261 = vunpack.c.l.b16 %v203
  %v262 = vunpack.c.h.b16 %v203
  %v263 = vunpack.c.l.b16 %v204
  %v264 = vunpack.c.h.b16 %v204
  %v265 = vpack.c.b16 %v235, %v233
  %v266 = vpack.c.b16 %v236, %v234
  %v267 = vpack.c.b16 %v239, %v237
  %v268 = vpack.c.b16 %v240, %v238
  %v269 = vpack.c.b16 %v243, %v241
  %v270 = vpack.c.b16 %v244, %v242
  %v271 = vpack.c.b16 %v247, %v245
  %v272 = vpack.c.b16 %v248, %v246
  %v273 = vpack.c.b16 %v251, %v249
  %v274 = vpack.c.b16 %v252, %v250
  %v275 = vpack.c.b16 %v255, %v253
  %v276 = vpack.c.b16 %v256, %v254
  %v277 = vpack.c.b16 %v259, %v257
  %v278 = vpack.c.b16 %v260, %v258
  %v279 = vpack.c.b16 %v263, %v261
  %v280 = vpack.c.b16 %v264, %v262
  %297 = vmatprep.subr.bf16.mxu0 %v266
  %298 = vmatpush1.bf16.msra.mxu0 %v265
  %299 = vmatprep.subr.bf16.mxu0 %v268
  %300 = vmatpush1.bf16.msra.mxu0 %v267
  %301 = vmatprep.subr.bf16.mxu0 %v270
  %302 = vmatpush1.bf16.msra.mxu0 %v269
  %303 = vmatprep.subr.bf16.mxu0 %v272
  %304 = vmatpush1.bf16.msra.mxu0 %v271
  %305 = vmatprep.subr.bf16.mxu0 %v274
  %306 = vmatpush1.bf16.msra.mxu0 %v273
  %307 = vmatprep.subr.bf16.mxu0 %v276
  %308 = vmatpush1.bf16.msra.mxu0 %v275
  %309 = vmatprep.subr.bf16.mxu0 %v278
  %310 = vmatpush1.bf16.msra.mxu0 %v277
  %311 = vmatprep.subr.bf16.mxu0 %v280
  %312 = vmatpush1.bf16.msra.mxu0 %v279
  %313 = vmatprep.subr.bf16.mxu0 0
  %314 = vmatpush1.bf16.msra.mxu0 0
  %315 = vmatprep.subr.bf16.mxu0 0
  %316 = vmatpush1.bf16.msra.mxu0 0
  %317 = vmatprep.subr.bf16.mxu0 0
  %318 = vmatpush1.bf16.msra.mxu0 0
  %319 = vmatprep.subr.bf16.mxu0 0
  %320 = vmatpush1.bf16.msra.mxu0 0
  %321 = vmatprep.subr.bf16.mxu0 0
  %322 = vmatpush1.bf16.msra.mxu0 0
  %323 = vmatprep.subr.bf16.mxu0 0
  %324 = vmatpush1.bf16.msra.mxu0 0
  %325 = vmatprep.subr.bf16.mxu0 0
  %326 = vmatpush1.bf16.msra.mxu0 0
  %327 = vmatprep.subr.bf16.mxu0 0
  %328 = vmatpush1.bf16.msra.mxu0 0
  %329 = vmatprep.mubr.bf16.mxu0 0
  %330 = vmatmul.mubr.bf16.gmra.mrb[0].mxu0 %v188
  %v331 = vpop.f32.mrb[0].mxu0
  %v332 = vadd.f32 %v210, %v331
  %v333 = vpop.f32.mrb[0].mxu0
  %v334 = vadd.f32 %v214, %v333
  %v335 = vpop.f32.mrb[0].mxu0
  %v336 = vadd.f32 %v210, %v335
  %v337 = vpop.f32.mrb[0].mxu0
  %v338 = vadd.f32 %v214, %v337
  %339 = vdwg.mxu0
  %v340 = vld [vmem:[%s3] sm:$0xff]
  %v341 = vld [vmem:[%s3 + $0x8] sm:$0xff]
  %v342 = vld [vmem:[%s3 + $0x10] sm:$0xff]
  %v343 = vld [vmem:[%s3 + $0x18] sm:$0xff]
  %v344 = vld [vmem:[%s3 + $0x20] sm:$0xff]
  %v345 = vld [vmem:[%s3 + $0x28] sm:$0xff]
  %v346 = vld [vmem:[%s3 + $0x30] sm:$0xff]
  %v347 = vld [vmem:[%s3 + $0x38] sm:$0xff]
  %v348 = vld [vmem:[%s3 + $0x40] sm:$0xff]
  %v349 = vld [vmem:[%s3 + $0x48] sm:$0xff]
  %v350 = vld [vmem:[%s3 + $0x50] sm:$0xff]
  %v351 = vld [vmem:[%s3 + $0x58] sm:$0xff]
  %v352 = vld [vmem:[%s3 + $0x60] sm:$0xff]
  %v353 = vld [vmem:[%s3 + $0x68] sm:$0xff]
  %v354 = vld [vmem:[%s3 + $0x70] sm:$0xff]
  %v355 = vld [vmem:[%s3 + $0x78] sm:$0xff]
  %v356 = vld [vmem:[%s3 + $0x80] sm:$0xff]
  %v357 = vld [vmem:[%s3 + $0x88] sm:$0xff]
  %v358 = vld [vmem:[%s3 + $0x90] sm:$0xff]
  %v359 = vld [vmem:[%s3 + $0x98] sm:$0xff]
  %v360 = vld [vmem:[%s3 + $0xa0] sm:$0xff]
  %v361 = vld [vmem:[%s3 + $0xa8] sm:$0xff]
  %v362 = vld [vmem:[%s3 + $0xb0] sm:$0xff]
  %v363 = vld [vmem:[%s3 + $0xb8] sm:$0xff]
  %v364 = vld [vmem:[%s3 + $0xc0] sm:$0xff]
  %v365 = vld [vmem:[%s3 + $0xc8] sm:$0xff]
  %v366 = vld [vmem:[%s3 + $0xd0] sm:$0xff]
  %v367 = vld [vmem:[%s3 + $0xd8] sm:$0xff]
  %v368 = vld [vmem:[%s3 + $0xe0] sm:$0xff]
  %v369 = vld [vmem:[%s3 + $0xe8] sm:$0xff]
  %v370 = vld [vmem:[%s3 + $0xf0] sm:$0xff]
  %v371 = vld [vmem:[%s3 + $0xf8] sm:$0xff]
  %v372 = vld [vmem:[%s3 + $0x100] sm:$0xff]
  %v373 = vld [vmem:[%s3 + $0x108] sm:$0xff]
  %v374 = vld [vmem:[%s3 + $0x110] sm:$0xff]
  %v375 = vld [vmem:[%s3 + $0x118] sm:$0xff]
  %v376 = vld [vmem:[%s3 + $0x120] sm:$0xff]
  %v377 = vld [vmem:[%s3 + $0x128] sm:$0xff]
  %v378 = vld [vmem:[%s3 + $0x130] sm:$0xff]
  %v379 = vld [vmem:[%s3 + $0x138] sm:$0xff]
  %v380 = vld [vmem:[%s3 + $0x140] sm:$0xff]
  %v381 = vld [vmem:[%s3 + $0x148] sm:$0xff]
  %v382 = vld [vmem:[%s3 + $0x150] sm:$0xff]
  %v383 = vld [vmem:[%s3 + $0x158] sm:$0xff]
  %v384 = vld [vmem:[%s3 + $0x160] sm:$0xff]
  %v385 = vld [vmem:[%s3 + $0x168] sm:$0xff]
  %v386 = vld [vmem:[%s3 + $0x170] sm:$0xff]
  %v387 = vld [vmem:[%s3 + $0x178] sm:$0xff]
  %v388 = vld [vmem:[%s3 + $0x180] sm:$0xff]
  %v389 = vld [vmem:[%s3 + $0x188] sm:$0xff]
  %v390 = vld [vmem:[%s3 + $0x190] sm:$0xff]
  %v391 = vld [vmem:[%s3 + $0x198] sm:$0xff]
  %v392 = vld [vmem:[%s3 + $0x1a0] sm:$0xff]
  %v393 = vld [vmem:[%s3 + $0x1a8] sm:$0xff]
  %v394 = vld [vmem:[%s3 + $0x1b0] sm:$0xff]
  %v395 = vld [vmem:[%s3 + $0x1b8] sm:$0xff]
  %v396 = vld [vmem:[%s3 + $0x1c0] sm:$0xff]
  %v397 = vld [vmem:[%s3 + $0x1c8] sm:$0xff]
  %v398 = vld [vmem:[%s3 + $0x1d0] sm:$0xff]
  %v399 = vld [vmem:[%s3 + $0x1d8] sm:$0xff]
  %v400 = vld [vmem:[%s3 + $0x1e0] sm:$0xff]
  %v401 = vld [vmem:[%s3 + $0x1e8] sm:$0xff]
  %v402 = vld [vmem:[%s3 + $0x1f0] sm:$0xff]
  %v403 = vld [vmem:[%s3 + $0x1f8] sm:$0xff]
  %v404 = vld [vmem:[%s3 + $0x200] sm:$0xff]
  %v405 = vld [vmem:[%s3 + $0x208] sm:$0xff]
  %v406 = vld [vmem:[%s3 + $0x210] sm:$0xff]
  %v407 = vld [vmem:[%s3 + $0x218] sm:$0xff]
  %v408 = vld [vmem:[%s3 + $0x220] sm:$0xff]
  %v409 = vld [vmem:[%s3 + $0x228] sm:$0xff]
  %v410 = vld [vmem:[%s3 + $0x230] sm:$0xff]
  %v411 = vld [vmem:[%s3 + $0x238] sm:$0xff]
  %v412 = vld [vmem:[%s3 + $0x240] sm:$0xff]
  %v413 = vld [vmem:[%s3 + $0x248] sm:$0xff]
  %v414 = vld [vmem:[%s3 + $0x250] sm:$0xff]
  %v415 = vld [vmem:[%s3 + $0x258] sm:$0xff]
  %v416 = vld [vmem:[%s3 + $0x260] sm:$0xff]
  %v417 = vld [vmem:[%s3 + $0x268] sm:$0xff]
  %v418 = vld [vmem:[%s3 + $0x270] sm:$0xff]
  %v419 = vld [vmem:[%s3 + $0x278] sm:$0xff]
  %v420 = vld [vmem:[%s3 + $0x280] sm:$0xff]
  %v421 = vld [vmem:[%s3 + $0x288] sm:$0xff]
  %v422 = vld [vmem:[%s3 + $0x290] sm:$0xff]
  %v423 = vld [vmem:[%s3 + $0x298] sm:$0xff]
  %v424 = vld [vmem:[%s3 + $0x2a0] sm:$0xff]
  %v425 = vld [vmem:[%s3 + $0x2a8] sm:$0xff]
  %v426 = vld [vmem:[%s3 + $0x2b0] sm:$0xff]
  %v427 = vld [vmem:[%s3 + $0x2b8] sm:$0xff]
  %v428 = vld [vmem:[%s3 + $0x2c0] sm:$0xff]
  %v429 = vld [vmem:[%s3 + $0x2c8] sm:$0xff]
  %v430 = vld [vmem:[%s3 + $0x2d0] sm:$0xff]
  %v431 = vld [vmem:[%s3 + $0x2d8] sm:$0xff]
  %v432 = vld [vmem:[%s3 + $0x2e0] sm:$0xff]
  %v433 = vld [vmem:[%s3 + $0x2e8] sm:$0xff]
  %v434 = vld [vmem:[%s3 + $0x2f0] sm:$0xff]
  %v435 = vld [vmem:[%s3 + $0x2f8] sm:$0xff]
  %v436 = vmul.f32 %v340, %v332
  %v437 = vmul.f32 %v341, %v334
  %v438 = vmul.f32 %v342, %v336
  %v439 = vmul.f32 %v343, %v338
  %v440 = vmul.f32 %v344, %v332
  %v441 = vmul.f32 %v345, %v334
  %v442 = vmul.f32 %v346, %v336
  %v443 = vmul.f32 %v347, %v338
  %v444 = vmul.f32 %v348, %v332
  %v445 = vmul.f32 %v349, %v334
  %v446 = vmul.f32 %v350, %v336
  %v447 = vmul.f32 %v351, %v338
  %v448 = vmul.f32 %v352, %v332
  %v449 = vmul.f32 %v353, %v334
  %v450 = vmul.f32 %v354, %v336
  %v451 = vmul.f32 %v355, %v338
  %v452 = vmul.f32 %v356, %v332
  %v453 = vmul.f32 %v357, %v334
  %v454 = vmul.f32 %v358, %v336
  %v455 = vmul.f32 %v359, %v338
  %v456 = vmul.f32 %v360, %v332
  %v457 = vmul.f32 %v361, %v334
  %v458 = vmul.f32 %v362, %v336
  %v459 = vmul.f32 %v363, %v338
  %v460 = vmul.f32 %v364, %v332
  %v461 = vmul.f32 %v365, %v334
  %v462 = vmul.f32 %v366, %v336
  %v463 = vmul.f32 %v367, %v338
  %v464 = vmul.f32 %v368, %v332
  %v465 = vmul.f32 %v369, %v334
  %v466 = vmul.f32 %v370, %v336
  %v467 = vmul.f32 %v371, %v338
  %v468 = vmul.f32 %v372, %v332
  %v469 = vmul.f32 %v373, %v334
  %v470 = vmul.f32 %v374, %v336
  %v471 = vmul.f32 %v375, %v338
  %v472 = vmul.f32 %v376, %v332
  %v473 = vmul.f32 %v377, %v334
  %v474 = vmul.f32 %v378, %v336
  %v475 = vmul.f32 %v379, %v338
  %v476 = vmul.f32 %v380, %v332
  %v477 = vmul.f32 %v381, %v334
  %v478 = vmul.f32 %v382, %v336
  %v479 = vmul.f32 %v383, %v338
  %v480 = vmul.f32 %v384, %v332
  %v481 = vmul.f32 %v385, %v334
  %v482 = vmul.f32 %v386, %v336
  %v483 = vmul.f32 %v387, %v338
  %v484 = vmul.f32 %v388, %v332
  %v485 = vmul.f32 %v389, %v334
  %v486 = vmul.f32 %v390, %v336
  %v487 = vmul.f32 %v391, %v338
  %v488 = vmul.f32 %v392, %v332
  %v489 = vmul.f32 %v393, %v334
  %v490 = vmul.f32 %v394, %v336
  %v491 = vmul.f32 %v395, %v338
  %v492 = vmul.f32 %v396, %v332
  %v493 = vmul.f32 %v397, %v334
  %v494 = vmul.f32 %v398, %v336
  %v495 = vmul.f32 %v399, %v338
  %v496 = vmul.f32 %v400, %v332
  %v497 = vmul.f32 %v401, %v334
  %v498 = vmul.f32 %v402, %v336
  %v499 = vmul.f32 %v403, %v338
  %v500 = vmul.f32 %v404, %v332
  %v501 = vmul.f32 %v405, %v334
  %v502 = vmul.f32 %v406, %v336
  %v503 = vmul.f32 %v407, %v338
  %v504 = vmul.f32 %v408, %v332
  %v505 = vmul.f32 %v409, %v334
  %v506 = vmul.f32 %v410, %v336
  %v507 = vmul.f32 %v411, %v338
  %v508 = vmul.f32 %v412, %v332
  %v509 = vmul.f32 %v413, %v334
  %v510 = vmul.f32 %v414, %v336
  %v511 = vmul.f32 %v415, %v338
  %v512 = vmul.f32 %v416, %v332
  %v513 = vmul.f32 %v417, %v334
  %v514 = vmul.f32 %v418, %v336
  %v515 = vmul.f32 %v419, %v338
  %v516 = vmul.f32 %v420, %v332
  %v517 = vmul.f32 %v421, %v334
  %v518 = vmul.f32 %v422, %v336
  %v519 = vmul.f32 %v423, %v338
  %v520 = vmul.f32 %v424, %v332
  %v521 = vmul.f32 %v425, %v334
  %v522 = vmul.f32 %v426, %v336
  %v523 = vmul.f32 %v427, %v338
  %v524 = vmul.f32 %v428, %v332
  %v525 = vmul.f32 %v429, %v334
  %v526 = vmul.f32 %v430, %v336
  %v527 = vmul.f32 %v431, %v338
  %v528 = vmul.f32 %v432, %v332
  %v529 = vmul.f32 %v433, %v334
  %v530 = vmul.f32 %v434, %v336
  %v531 = vmul.f32 %v435, %v338
  %v532 = vpack.c.bf16 %v438, %v436
  %v533 = vpack.c.bf16 %v439, %v437
  %v534 = vpack.c.bf16 %v442, %v440
  %v535 = vpack.c.bf16 %v443, %v441
  %v536 = vpack.c.bf16 %v446, %v444
  %v537 = vpack.c.bf16 %v447, %v445
  %v538 = vpack.c.bf16 %v450, %v448
  %v539 = vpack.c.bf16 %v451, %v449
  %v540 = vpack.c.bf16 %v454, %v452
  %v541 = vpack.c.bf16 %v455, %v453
  %v542 = vpack.c.bf16 %v458, %v456
  %v543 = vpack.c.bf16 %v459, %v457
  %v544 = vpack.c.bf16 %v462, %v460
  %v545 = vpack.c.bf16 %v463, %v461
  %v546 = vpack.c.bf16 %v466, %v464
  %v547 = vpack.c.bf16 %v467, %v465
  %v548 = vpack.c.bf16 %v470, %v468
  %v549 = vpack.c.bf16 %v471, %v469
  %v550 = vpack.c.bf16 %v474, %v472
  %v551 = vpack.c.bf16 %v475, %v473
  %v552 = vpack.c.bf16 %v478, %v476
  %v553 = vpack.c.bf16 %v479, %v477
  %v554 = vpack.c.bf16 %v482, %v480
  %v555 = vpack.c.bf16 %v483, %v481
  %v556 = vpack.c.bf16 %v486, %v484
  %v557 = vpack.c.bf16 %v487, %v485
  %v558 = vpack.c.bf16 %v490, %v488
  %v559 = vpack.c.bf16 %v491, %v489
  %v560 = vpack.c.bf16 %v494, %v492
  %v561 = vpack.c.bf16 %v495, %v493
  %v562 = vpack.c.bf16 %v498, %v496
  %v563 = vpack.c.bf16 %v499, %v497
  %v564 = vpack.c.bf16 %v502, %v500
  %v565 = vpack.c.bf16 %v503, %v501
  %v566 = vpack.c.bf16 %v506, %v504
  %v567 = vpack.c.bf16 %v507, %v505
  %v568 = vpack.c.bf16 %v510, %v508
  %v569 = vpack.c.bf16 %v511, %v509
  %v570 = vpack.c.bf16 %v514, %v512
  %v571 = vpack.c.bf16 %v515, %v513
  %v572 = vpack.c.bf16 %v518, %v516
  %v573 = vpack.c.bf16 %v519, %v517
  %v574 = vpack.c.bf16 %v522, %v520
  %v575 = vpack.c.bf16 %v523, %v521
  %v576 = vpack.c.bf16 %v526, %v524
  %v577 = vpack.c.bf16 %v527, %v525
  %v578 = vpack.c.bf16 %v530, %v528
  %v579 = vpack.c.bf16 %v531, %v529
  %v580 = vld [vmem:[%s1] sm:$0xff]
  %v581 = vld [vmem:[%s1 + $0x8] sm:$0xf]
  %v582 = vld [vmem:[%s1 + $0xc] sm:$0xff]
  %v583 = vld [vmem:[%s1 + $0x14] sm:$0xf]
  %v588 = vunpack.c.l.b16 %v580
  %v589 = vunpack.c.h.b16 %v580
  %v590 = vunpack.c.l.b16 %v581
  %v591 = vunpack.c.l.b16 %v582
  %v592 = vunpack.c.h.b16 %v582
  %v593 = vunpack.c.l.b16 %v583
  %v594 = vpack.c.b16 %v591, %v588
  %v595 = vpack.c.b16 %v592, %v589
  %v596 = vpack.c.b16 %v593, %v590
  %600 = vmatprep.subr.bf16.mxu0 0
  %601 = vmatpush1.bf16.msra.mxu0 %v532
  %602 = vmatprep.subr.bf16.mxu0 0
  %603 = vmatpush1.bf16.msra.mxu0 %v534
  %604 = vmatprep.subr.bf16.mxu0 0
  %605 = vmatpush1.bf16.msra.mxu0 %v536
  %606 = vmatprep.subr.bf16.mxu0 0
  %607 = vmatpush1.bf16.msra.mxu0 %v538
  %608 = vmatprep.subr.bf16.mxu0 0
  %609 = vmatpush1.bf16.msra.mxu0 %v540
  %610 = vmatprep.subr.bf16.mxu0 0
  %611 = vmatpush1.bf16.msra.mxu0 %v542
  %612 = vmatprep.subr.bf16.mxu0 0
  %613 = vmatpush1.bf16.msra.mxu0 %v544
  %614 = vmatprep.subr.bf16.mxu0 0
  %615 = vmatpush1.bf16.msra.mxu0 %v546
  %616 = vmatprep.subr.bf16.mxu0 0
  %617 = vmatpush1.bf16.msra.mxu0 %v548
  %618 = vmatprep.subr.bf16.mxu0 0
  %619 = vmatpush1.bf16.msra.mxu0 %v550
  %620 = vmatprep.subr.bf16.mxu0 0
  %621 = vmatpush1.bf16.msra.mxu0 %v552
  %622 = vmatprep.subr.bf16.mxu0 0
  %623 = vmatpush1.bf16.msra.mxu0 %v554
  %624 = vmatprep.subr.bf16.mxu0 0
  %625 = vmatpush1.bf16.msra.mxu0 %v556
  %626 = vmatprep.subr.bf16.mxu0 0
  %627 = vmatpush1.bf16.msra.mxu0 %v558
  %628 = vmatprep.subr.bf16.mxu0 0
  %629 = vmatpush1.bf16.msra.mxu0 %v560
  %630 = vmatprep.subr.bf16.mxu0 0
  %631 = vmatpush1.bf16.msra.mxu0 %v562
  %632 = vmatprep.mubr.bf16.mxu0 %v595
  %633 = vmatmul.mubr.bf16.gmra.mrb[0].mxu0 %v594
  %v634 = vpop.f32.mrb[0].mxu0
  %v635 = vadd.f32 0.0, %v634
  %v636 = vpop.f32.mrb[0].mxu0
  %v637 = vpop.f32.mrb[0].mxu0
  %v638 = vadd.f32 0.0, %v637
  %v639 = vpop.f32.mrb[0].mxu0
  %640 = vdwg.mxu0
  %641 = vmatprep.subr.bf16.mxu0 0
  %642 = vmatpush1.bf16.msra.mxu0 %v564
  %643 = vmatprep.subr.bf16.mxu0 0
  %644 = vmatpush1.bf16.msra.mxu0 %v566
  %645 = vmatprep.subr.bf16.mxu0 0
  %646 = vmatpush1.bf16.msra.mxu0 %v568
  %647 = vmatprep.subr.bf16.mxu0 0
  %648 = vmatpush1.bf16.msra.mxu0 %v570
  %649 = vmatprep.subr.bf16.mxu0 0
  %650 = vmatpush1.bf16.msra.mxu0 %v572
  %651 = vmatprep.subr.bf16.mxu0 0
  %652 = vmatpush1.bf16.msra.mxu0 %v574
  %653 = vmatprep.subr.bf16.mxu0 0
  %654 = vmatpush1.bf16.msra.mxu0 %v576
  %655 = vmatprep.subr.bf16.mxu0 0
  %656 = vmatpush1.bf16.msra.mxu0 %v578
  %657 = vmatprep.subr.bf16.mxu0 0
  %658 = vmatpush1.bf16.msra.mxu0 0
  %659 = vmatprep.subr.bf16.mxu0 0
  %660 = vmatpush1.bf16.msra.mxu0 0
  %661 = vmatprep.subr.bf16.mxu0 0
  %662 = vmatpush1.bf16.msra.mxu0 0
  %663 = vmatprep.subr.bf16.mxu0 0
  %664 = vmatpush1.bf16.msra.mxu0 0
  %665 = vmatprep.subr.bf16.mxu0 0
  %666 = vmatpush1.bf16.msra.mxu0 0
  %667 = vmatprep.subr.bf16.mxu0 0
  %668 = vmatpush1.bf16.msra.mxu0 0
  %669 = vmatprep.subr.bf16.mxu0 0
  %670 = vmatpush1.bf16.msra.mxu0 0
  %671 = vmatprep.subr.bf16.mxu0 0
  %672 = vmatpush1.bf16.msra.mxu0 0
  %673 = vmatprep.mubr.bf16.mxu0 0
  %674 = vmatmul.mubr.bf16.gmra.mrb[0].mxu0 %v596
  %v675 = vpop.f32.mrb[0].mxu0
  %v676 = vadd.f32 %v635, %v675
  %v677 = vpop.f32.mrb[0].mxu0
  %v678 = vpop.f32.mrb[0].mxu0
  %v679 = vadd.f32 %v638, %v678
  %v680 = vpop.f32.mrb[0].mxu0
  %681 = vdwg.mxu0
  %v682 = vld [vmem:[%s2] sm:$0xff]
  %v683 = vld [vmem:[%s2 + $0x8] sm:$0xf]
  %v684 = vld [vmem:[%s2 + $0xc] sm:$0xff]
  %v685 = vld [vmem:[%s2 + $0x14] sm:$0xf]
  %v686 = vld [vmem:[%s2 + $0x18] sm:$0xff]
  %v687 = vld [vmem:[%s2 + $0x20] sm:$0xf]
  %v688 = vld [vmem:[%s2 + $0x24] sm:$0xff]
  %v689 = vld [vmem:[%s2 + $0x2c] sm:$0xf]
  %v690 = vld [vmem:[%s2 + $0x30] sm:$0xff]
  %v691 = vld [vmem:[%s2 + $0x38] sm:$0xf]
  %v692 = vld [vmem:[%s2 + $0x3c] sm:$0xff]
  %v693 = vld [vmem:[%s2 + $0x44] sm:$0xf]
  %v706 = vunpack.c.l.b16 %v682
  %v707 = vunpack.c.h.b16 %v682
  %v708 = vunpack.c.l.b16 %v683
  %v709 = vunpack.c.l.b16 %v684
  %v710 = vunpack.c.h.b16 %v684
  %v711 = vunpack.c.l.b16 %v685
  %v712 = vunpack.c.l.b16 %v686
  %v713 = vunpack.c.h.b16 %v686
  %v714 = vunpack.c.l.b16 %v687
  %v715 = vunpack.c.l.b16 %v688
  %v716 = vunpack.c.h.b16 %v688
  %v717 = vunpack.c.l.b16 %v689
  %v718 = vunpack.c.l.b16 %v690
  %v719 = vunpack.c.h.b16 %v690
  %v720 = vunpack.c.l.b16 %v691
  %v721 = vunpack.c.l.b16 %v692
  %v722 = vunpack.c.h.b16 %v692
  %v723 = vunpack.c.l.b16 %v693
  %v724 = vpack.c.b16 %v709, %v706
  %v725 = vpack.c.b16 %v710, %v707
  %v726 = vpack.c.b16 %v711, %v708
  %v727 = vpack.c.b16 %v715, %v712
  %v728 = vpack.c.b16 %v716, %v713
  %v729 = vpack.c.b16 %v717, %v714
  %v730 = vpack.c.b16 %v721, %v718
  %v731 = vpack.c.b16 %v722, %v719
  %v732 = vpack.c.b16 %v723, %v720
  %742 = vmatprep.subr.bf16.mxu0 0
  %743 = vmatpush1.bf16.msra.mxu0 %v533
  %744 = vmatprep.subr.bf16.mxu0 0
  %745 = vmatpush1.bf16.msra.mxu0 %v535
  %746 = vmatprep.subr.bf16.mxu0 0
  %747 = vmatpush1.bf16.msra.mxu0 %v537
  %748 = vmatprep.subr.bf16.mxu0 0
  %749 = vmatpush1.bf16.msra.mxu0 %v539
  %750 = vmatprep.subr.bf16.mxu0 0
  %751 = vmatpush1.bf16.msra.mxu0 %v541
  %752 = vmatprep.subr.bf16.mxu0 0
  %753 = vmatpush1.bf16.msra.mxu0 %v543
  %754 = vmatprep.subr.bf16.mxu0 0
  %755 = vmatpush1.bf16.msra.mxu0 %v545
  %756 = vmatprep.subr.bf16.mxu0 0
  %757 = vmatpush1.bf16.msra.mxu0 %v547
  %758 = vmatprep.subr.bf16.mxu0 0
  %759 = vmatpush1.bf16.msra.mxu0 %v549
  %760 = vmatprep.subr.bf16.mxu0 0
  %761 = vmatpush1.bf16.msra.mxu0 %v551
  %762 = vmatprep.subr.bf16.mxu0 0
  %763 = vmatpush1.bf16.msra.mxu0 %v553
  %764 = vmatprep.subr.bf16.mxu0 0
  %765 = vmatpush1.bf16.msra.mxu0 %v555
  %766 = vmatprep.subr.bf16.mxu0 0
  %767 = vmatpush1.bf16.msra.mxu0 %v557
  %768 = vmatprep.subr.bf16.mxu0 0
  %769 = vmatpush1.bf16.msra.mxu0 %v559
  %770 = vmatprep.subr.bf16.mxu0 0
  %771 = vmatpush1.bf16.msra.mxu0 %v561
  %772 = vmatprep.subr.bf16.mxu0 0
  %773 = vmatpush1.bf16.msra.mxu0 %v563
  %774 = vmatprep.mubr.bf16.mxu0 %v725
  %775 = vmatmul.mubr.bf16.gmra.mrb[0].mxu0 %v724
  %v776 = vpop.f32.mrb[0].mxu0
  %v777 = vadd.f32 0.0, %v776
  %v778 = vpop.f32.mrb[0].mxu0
  %v779 = vpop.f32.mrb[0].mxu0
  %v780 = vadd.f32 0.0, %v779
  %v781 = vpop.f32.mrb[0].mxu0
  %782 = vmatprep.mubr.bf16.mxu0 %v728
  %783 = vmatmul.mubr.bf16.gmra.mrb[0].mxu0 %v727
  %v784 = vpop.f32.mrb[0].mxu0
  %v785 = vadd.f32 0.0, %v784
  %v786 = vpop.f32.mrb[0].mxu0
  %v787 = vpop.f32.mrb[0].mxu0
  %v788 = vadd.f32 0.0, %v787
  %v789 = vpop.f32.mrb[0].mxu0
  %790 = vmatprep.mubr.bf16.mxu0 %v731
  %791 = vmatmul.mubr.bf16.gmra.mrb[0].mxu0 %v730
  %v792 = vpop.f32.mrb[0].mxu0
  %v793 = vadd.f32 0.0, %v792
  %v794 = vpop.f32.mrb[0].mxu0
  %v795 = vpop.f32.mrb[0].mxu0
  %v796 = vadd.f32 0.0, %v795
  %v797 = vpop.f32.mrb[0].mxu0
  %798 = vdwg.mxu0
  %799 = vmatprep.subr.bf16.mxu0 0
  %800 = vmatpush1.bf16.msra.mxu0 %v565
  %801 = vmatprep.subr.bf16.mxu0 0
  %802 = vmatpush1.bf16.msra.mxu0 %v567
  %803 = vmatprep.subr.bf16.mxu0 0
  %804 = vmatpush1.bf16.msra.mxu0 %v569
  %805 = vmatprep.subr.bf16.mxu0 0
  %806 = vmatpush1.bf16.msra.mxu0 %v571
  %807 = vmatprep.subr.bf16.mxu0 0
  %808 = vmatpush1.bf16.msra.mxu0 %v573
  %809 = vmatprep.subr.bf16.mxu0 0
  %810 = vmatpush1.bf16.msra.mxu0 %v575
  %811 = vmatprep.subr.bf16.mxu0 0
  %812 = vmatpush1.bf16.msra.mxu0 %v577
  %813 = vmatprep.subr.bf16.mxu0 0
  %814 = vmatpush1.bf16.msra.mxu0 %v579
  %815 = vmatprep.subr.bf16.mxu0 0
  %816 = vmatpush1.bf16.msra.mxu0 0
  %817 = vmatprep.subr.bf16.mxu0 0
  %818 = vmatpush1.bf16.msra.mxu0 0
  %819 = vmatprep.subr.bf16.mxu0 0
  %820 = vmatpush1.bf16.msra.mxu0 0
  %821 = vmatprep.subr.bf16.mxu0 0
  %822 = vmatpush1.bf16.msra.mxu0 0
  %823 = vmatprep.subr.bf16.mxu0 0
  %824 = vmatpush1.bf16.msra.mxu0 0
  %825 = vmatprep.subr.bf16.mxu0 0
  %826 = vmatpush1.bf16.msra.mxu0 0
  %827 = vmatprep.subr.bf16.mxu0 0
  %828 = vmatpush1.bf16.msra.mxu0 0
  %829 = vmatprep.subr.bf16.mxu0 0
  %830 = vmatpush1.bf16.msra.mxu0 0
  %831 = vmatprep.mubr.bf16.mxu0 0
  %832 = vmatmul.mubr.bf16.gmra.mrb[0].mxu0 %v726
  %v833 = vpop.f32.mrb[0].mxu0
  %v834 = vadd.f32 %v777, %v833
  %v835 = vpop.f32.mrb[0].mxu0
  %v836 = vpop.f32.mrb[0].mxu0
  %v837 = vadd.f32 %v780, %v836
  %v838 = vpop.f32.mrb[0].mxu0
  %839 = vmatprep.mubr.bf16.mxu0 0
  %840 = vmatmul.mubr.bf16.gmra.mrb[0].mxu0 %v729
  %v841 = vpop.f32.mrb[0].mxu0
  %v842 = vadd.f32 %v785, %v841
  %v843 = vpop.f32.mrb[0].mxu0
  %v844 = vpop.f32.mrb[0].mxu0
  %v845 = vadd.f32 %v788, %v844
  %v846 = vpop.f32.mrb[0].mxu0
  %847 = vmatprep.mubr.bf16.mxu0 0
  %848 = vmatmul.mubr.bf16.gmra.mrb[0].mxu0 %v732
  %v849 = vpop.f32.mrb[0].mxu0
  %v850 = vadd.f32 %v793, %v849
  %v851 = vpop.f32.mrb[0].mxu0
  %v852 = vpop.f32.mrb[0].mxu0
  %v853 = vadd.f32 %v796, %v852
  %v854 = vpop.f32.mrb[0].mxu0
  %855 = vdwg.mxu0
  %v856 = vld [vmem:[%s10] sm:$0x1]
  %v858 = vlaneseq
  %v859 = vshrl.u32 %v858, 7
  %v860 = vsub.s32 0, %v859
  %v861 = vrot.slane %v856, %v860
  %v863 = vld [vmem:[%s12] sm:$0x7]
  %v865 = vlaneseq
  %v866 = vshrl.u32 %v865, 7
  %v867 = vsub.s32 0, %v866
  %v868 = vrot.slane %v863, %v867
  %v869 = vlaneseq
  %v870 = vshrl.u32 %v869, 7
  %v871 = vsub.s32 1, %v870
  %v872 = vrot.slane %v863, %v871
  %v873 = vlaneseq
  %v874 = vshrl.u32 %v873, 7
  %v875 = vsub.s32 2, %v874
  %v876 = vrot.slane %v863, %v875
  %v880 = vadd.f32 %v59, %v676
  %v881 = vadd.f32 %v60, %v679
  %v882 = vadd.f32 %v834, 0.0
  %v883 = vadd.f32 %v837, 0.0
  %v884 = vadd.f32 %v842, 0.0
  %v885 = vadd.f32 %v845, 0.0
  %v886 = vadd.f32 %v850, 0.0
  %v887 = vadd.f32 %v853, 0.0
  %v888 = vpack.c.bf16 %v883, %v882
  %v889 = vpack.c.bf16 %v885, %v884
  %v890 = vpack.c.bf16 %v887, %v886
  %v891 = vld [vmem:[%s8] sm:$0xff]
  %v892 = vld [vmem:[%s8 + $0x8] sm:$0xff]
  %v893 = vld [vmem:[%s8 + $0x10] sm:$0xff]
  %v894 = vld [vmem:[%s8 + $0x18] sm:$0xff]
  %v895 = vld [vmem:[%s8 + $0x20] sm:$0xff]
  %v896 = vld [vmem:[%s8 + $0x28] sm:$0xff]
  %v897 = vld [vmem:[%s8 + $0x30] sm:$0xff]
  %v898 = vld [vmem:[%s8 + $0x38] sm:$0xff]
  %v899 = vld [vmem:[%s8 + $0x40] sm:$0xff]
  %v900 = vld [vmem:[%s8 + $0x48] sm:$0xff]
  %v901 = vld [vmem:[%s8 + $0x50] sm:$0xff]
  %v902 = vld [vmem:[%s8 + $0x58] sm:$0xff]
  %v903 = vld [vmem:[%s8 + $0x60] sm:$0xff]
  %v904 = vld [vmem:[%s8 + $0x68] sm:$0xff]
  %v905 = vld [vmem:[%s8 + $0x70] sm:$0xff]
  %v906 = vld [vmem:[%s8 + $0x78] sm:$0xff]
  %v923 = vunpack.c.l.b16 %v891
  %v924 = vunpack.c.h.b16 %v891
  %v925 = vunpack.c.l.b16 %v892
  %v926 = vunpack.c.h.b16 %v892
  %v927 = vunpack.c.l.b16 %v893
  %v928 = vunpack.c.h.b16 %v893
  %v929 = vunpack.c.l.b16 %v894
  %v930 = vunpack.c.h.b16 %v894
  %v931 = vunpack.c.l.b16 %v895
  %v932 = vunpack.c.h.b16 %v895
  %v933 = vunpack.c.l.b16 %v896
  %v934 = vunpack.c.h.b16 %v896
  %v935 = vunpack.c.l.b16 %v897
  %v936 = vunpack.c.h.b16 %v897
  %v937 = vunpack.c.l.b16 %v898
  %v938 = vunpack.c.h.b16 %v898
  %v939 = vunpack.c.l.b16 %v899
  %v940 = vunpack.c.h.b16 %v899
  %v941 = vunpack.c.l.b16 %v900
  %v942 = vunpack.c.h.b16 %v900
  %v943 = vunpack.c.l.b16 %v901
  %v944 = vunpack.c.h.b16 %v901
  %v945 = vunpack.c.l.b16 %v902
  %v946 = vunpack.c.h.b16 %v902
  %v947 = vunpack.c.l.b16 %v903
  %v948 = vunpack.c.h.b16 %v903
  %v949 = vunpack.c.l.b16 %v904
  %v950 = vunpack.c.h.b16 %v904
  %v951 = vunpack.c.l.b16 %v905
  %v952 = vunpack.c.h.b16 %v905
  %v953 = vunpack.c.l.b16 %v906
  %v954 = vunpack.c.h.b16 %v906
  %v955 = vpack.c.b16 %v925, %v923
  %v956 = vpack.c.b16 %v926, %v924
  %v957 = vpack.c.b16 %v929, %v927
  %v958 = vpack.c.b16 %v930, %v928
  %v959 = vpack.c.b16 %v933, %v931
  %v960 = vpack.c.b16 %v934, %v932
  %v961 = vpack.c.b16 %v937, %v935
  %v962 = vpack.c.b16 %v938, %v936
  %v963 = vpack.c.b16 %v941, %v939
  %v964 = vpack.c.b16 %v942, %v940
  %v965 = vpack.c.b16 %v945, %v943
  %v966 = vpack.c.b16 %v946, %v944
  %v967 = vpack.c.b16 %v949, %v947
  %v968 = vpack.c.b16 %v950, %v948
  %v969 = vpack.c.b16 %v953, %v951
  %v970 = vpack.c.b16 %v954, %v952
  %987 = vmatprep.subr.bf16.mxu0 %v956
  %988 = vmatpush1.bf16.msra.mxu0 %v955
  %989 = vmatprep.subr.bf16.mxu0 %v958
  %990 = vmatpush1.bf16.msra.mxu0 %v957
  %991 = vmatprep.subr.bf16.mxu0 %v960
  %992 = vmatpush1.bf16.msra.mxu0 %v959
  %993 = vmatprep.subr.bf16.mxu0 %v962
  %994 = vmatpush1.bf16.msra.mxu0 %v961
  %995 = vmatprep.subr.bf16.mxu0 %v964
  %996 = vmatpush1.bf16.msra.mxu0 %v963
  %997 = vmatprep.subr.bf16.mxu0 %v966
  %998 = vmatpush1.bf16.msra.mxu0 %v965
  %999 = vmatprep.subr.bf16.mxu0 %v968
  %1000 = vmatpush1.bf16.msra.mxu0 %v967
  %1001 = vmatprep.subr.bf16.mxu0 %v970
  %1002 = vmatpush1.bf16.msra.mxu0 %v969
  %1003 = vmatprep.subr.bf16.mxu0 0
  %1004 = vmatpush1.bf16.msra.mxu0 0
  %1005 = vmatprep.subr.bf16.mxu0 0
  %1006 = vmatpush1.bf16.msra.mxu0 0
  %1007 = vmatprep.subr.bf16.mxu0 0
  %1008 = vmatpush1.bf16.msra.mxu0 0
  %1009 = vmatprep.subr.bf16.mxu0 0
  %1010 = vmatpush1.bf16.msra.mxu0 0
  %1011 = vmatprep.subr.bf16.mxu0 0
  %1012 = vmatpush1.bf16.msra.mxu0 0
  %1013 = vmatprep.subr.bf16.mxu0 0
  %1014 = vmatpush1.bf16.msra.mxu0 0
  %1015 = vmatprep.subr.bf16.mxu0 0
  %1016 = vmatpush1.bf16.msra.mxu0 0
  %1017 = vmatprep.subr.bf16.mxu0 0
  %1018 = vmatpush1.bf16.msra.mxu0 0
  %1019 = vmatprep.mubr.bf16.mxu0 0
  %1020 = vmatmul.mubr.bf16.gmra.mrb[0].mxu0 %v888
  %v1021 = vpop.f32.mrb[0].mxu0
  %v1022 = vadd.f32 0.0, %v1021
  %v1023 = vpop.f32.mrb[0].mxu0
  %v1024 = vadd.f32 0.0, %v1023
  %v1025 = vpop.f32.mrb[0].mxu0
  %v1026 = vadd.f32 0.0, %v1025
  %v1027 = vpop.f32.mrb[0].mxu0
  %v1028 = vadd.f32 0.0, %v1027
  %1029 = vmatprep.mubr.bf16.mxu0 0
  %1030 = vmatmul.mubr.bf16.gmra.mrb[0].mxu0 %v889
  %v1031 = vpop.f32.mrb[0].mxu0
  %v1032 = vadd.f32 0.0, %v1031
  %v1033 = vpop.f32.mrb[0].mxu0
  %v1034 = vadd.f32 0.0, %v1033
  %v1035 = vpop.f32.mrb[0].mxu0
  %v1036 = vadd.f32 0.0, %v1035
  %v1037 = vpop.f32.mrb[0].mxu0
  %v1038 = vadd.f32 0.0, %v1037
  %1039 = vmatprep.mubr.bf16.mxu0 0
  %1040 = vmatmul.mubr.bf16.gmra.mrb[0].mxu0 %v890
  %v1041 = vpop.f32.mrb[0].mxu0
  %v1042 = vadd.f32 0.0, %v1041
  %v1043 = vpop.f32.mrb[0].mxu0
  %v1044 = vadd.f32 0.0, %v1043
  %v1045 = vpop.f32.mrb[0].mxu0
  %v1046 = vadd.f32 0.0, %v1045
  %v1047 = vpop.f32.mrb[0].mxu0
  %v1048 = vadd.f32 0.0, %v1047
  %1049 = vdwg.mxu0
  %v1050 = vmul.f32 %v1024, %v1024
  %v1051 = vmul.f32 %v1028, %v1028
  %v1052 = vmul.f32 %v1034, %v1034
  %v1053 = vmul.f32 %v1038, %v1038
  %v1054 = vadd.f32 %v1050, %v1052
  %v1055 = vadd.f32 %v1051, %v1053
  %v1056 = vmul.f32 %v1044, %v1044
  %v1057 = vmul.f32 %v1048, %v1048
  %v1058 = vadd.f32 %v1054, %v1056
  %v1059 = vadd.f32 %v1055, %v1057
  %v1060 = vadd.f32 %v1058, 1e-08
  %v1061 = vadd.f32 %v1059, 1e-08
  %v1062 = vrsqrt.pop %v1060
  %v1063 = vmul.f32 %v1060, %v1062
  %vm1064 = vcmp.eq.f32.partialorder %v1060, inf
  %v1065 = vsel %vm1064, %v1060, %v1063
  %vm1066 = vcmp.eq.f32.partialorder %v1060, 0.0
  %v1067 = vand.u32 %v1060, 2147483648
  %v1068 = vsel %vm1066, %v1067, %v1065
  %v1069 = vrsqrt.pop %v1061
  %v1070 = vmul.f32 %v1061, %v1069
  %vm1071 = vcmp.eq.f32.partialorder %v1061, inf
  %v1072 = vsel %vm1071, %v1061, %v1070
  %vm1073 = vcmp.eq.f32.partialorder %v1061, 0.0
  %v1074 = vand.u32 %v1061, 2147483648
  %v1075 = vsel %vm1073, %v1074, %v1072
  %v1076 = vpack.c.bf16 %v881, %v880
  %v1077 = vpack.c.bf16 %v1075, %v1068
  %v1078 = vld [vmem:[%s9] sm:$0xf]
  %v1079 = vld [vmem:[%s9 + $0x4] sm:$0xf]
  %v1080 = vld [vmem:[%s9 + $0x8] sm:$0xf]
  %v1081 = vld [vmem:[%s9 + $0xc] sm:$0xf]
  %v1082 = vld [vmem:[%s9 + $0x10] sm:$0xf]
  %v1083 = vld [vmem:[%s9 + $0x14] sm:$0xf]
  %v1084 = vld [vmem:[%s9 + $0x18] sm:$0xf]
  %v1085 = vld [vmem:[%s9 + $0x1c] sm:$0xf]
  %v1086 = vld [vmem:[%s9 + $0x20] sm:$0xf]
  %v1087 = vld [vmem:[%s9 + $0x24] sm:$0xf]
  %v1088 = vld [vmem:[%s9 + $0x28] sm:$0xf]
  %v1089 = vld [vmem:[%s9 + $0x2c] sm:$0xf]
  %v1090 = vld [vmem:[%s9 + $0x30] sm:$0xf]
  %v1091 = vld [vmem:[%s9 + $0x34] sm:$0xf]
  %v1092 = vld [vmem:[%s9 + $0x38] sm:$0xf]
  %v1093 = vld [vmem:[%s9 + $0x3c] sm:$0xf]
  %v1094 = vld [vmem:[%s9 + $0x40] sm:$0xf]
  %v1095 = vld [vmem:[%s9 + $0x44] sm:$0xf]
  %v1096 = vld [vmem:[%s9 + $0x48] sm:$0xf]
  %v1097 = vld [vmem:[%s9 + $0x4c] sm:$0xf]
  %v1098 = vld [vmem:[%s9 + $0x50] sm:$0xf]
  %v1099 = vld [vmem:[%s9 + $0x54] sm:$0xf]
  %v1100 = vld [vmem:[%s9 + $0x58] sm:$0xf]
  %v1101 = vld [vmem:[%s9 + $0x5c] sm:$0xf]
  %v1102 = vld [vmem:[%s9 + $0x60] sm:$0xf]
  %v1103 = vld [vmem:[%s9 + $0x64] sm:$0xf]
  %v1104 = vld [vmem:[%s9 + $0x68] sm:$0xf]
  %v1105 = vld [vmem:[%s9 + $0x6c] sm:$0xf]
  %v1106 = vld [vmem:[%s9 + $0x70] sm:$0xf]
  %v1107 = vld [vmem:[%s9 + $0x74] sm:$0xf]
  %v1108 = vld [vmem:[%s9 + $0x78] sm:$0xf]
  %v1109 = vld [vmem:[%s9 + $0x7c] sm:$0xf]
  %v1142 = vunpack.c.l.b16 %v1078
  %v1143 = vunpack.c.l.b16 %v1079
  %v1144 = vunpack.c.l.b16 %v1080
  %v1145 = vunpack.c.l.b16 %v1081
  %v1146 = vunpack.c.l.b16 %v1082
  %v1147 = vunpack.c.l.b16 %v1083
  %v1148 = vunpack.c.l.b16 %v1084
  %v1149 = vunpack.c.l.b16 %v1085
  %v1150 = vunpack.c.l.b16 %v1086
  %v1151 = vunpack.c.l.b16 %v1087
  %v1152 = vunpack.c.l.b16 %v1088
  %v1153 = vunpack.c.l.b16 %v1089
  %v1154 = vunpack.c.l.b16 %v1090
  %v1155 = vunpack.c.l.b16 %v1091
  %v1156 = vunpack.c.l.b16 %v1092
  %v1157 = vunpack.c.l.b16 %v1093
  %v1158 = vunpack.c.l.b16 %v1094
  %v1159 = vunpack.c.l.b16 %v1095
  %v1160 = vunpack.c.l.b16 %v1096
  %v1161 = vunpack.c.l.b16 %v1097
  %v1162 = vunpack.c.l.b16 %v1098
  %v1163 = vunpack.c.l.b16 %v1099
  %v1164 = vunpack.c.l.b16 %v1100
  %v1165 = vunpack.c.l.b16 %v1101
  %v1166 = vunpack.c.l.b16 %v1102
  %v1167 = vunpack.c.l.b16 %v1103
  %v1168 = vunpack.c.l.b16 %v1104
  %v1169 = vunpack.c.l.b16 %v1105
  %v1170 = vunpack.c.l.b16 %v1106
  %v1171 = vunpack.c.l.b16 %v1107
  %v1172 = vunpack.c.l.b16 %v1108
  %v1173 = vunpack.c.l.b16 %v1109
  %v1174 = vpack.c.b16 %v1143, %v1142
  %v1175 = vpack.c.b16 %v1145, %v1144
  %v1176 = vpack.c.b16 %v1147, %v1146
  %v1177 = vpack.c.b16 %v1149, %v1148
  %v1178 = vpack.c.b16 %v1151, %v1150
  %v1179 = vpack.c.b16 %v1153, %v1152
  %v1180 = vpack.c.b16 %v1155, %v1154
  %v1181 = vpack.c.b16 %v1157, %v1156
  %v1182 = vpack.c.b16 %v1159, %v1158
  %v1183 = vpack.c.b16 %v1161, %v1160
  %v1184 = vpack.c.b16 %v1163, %v1162
  %v1185 = vpack.c.b16 %v1165, %v1164
  %v1186 = vpack.c.b16 %v1167, %v1166
  %v1187 = vpack.c.b16 %v1169, %v1168
  %v1188 = vpack.c.b16 %v1171, %v1170
  %v1189 = vpack.c.b16 %v1173, %v1172
  %1206 = vmatprep.subr.bf16.mxu0 0
  %1207 = vmatpush1.bf16.msra.mxu0 %v1174
  %1208 = vmatprep.subr.bf16.mxu0 0
  %1209 = vmatpush1.bf16.msra.mxu0 %v1175
  %1210 = vmatprep.subr.bf16.mxu0 0
  %1211 = vmatpush1.bf16.msra.mxu0 %v1176
  %1212 = vmatprep.subr.bf16.mxu0 0
  %1213 = vmatpush1.bf16.msra.mxu0 %v1177
  %1214 = vmatprep.subr.bf16.mxu0 0
  %1215 = vmatpush1.bf16.msra.mxu0 %v1178
  %1216 = vmatprep.subr.bf16.mxu0 0
  %1217 = vmatpush1.bf16.msra.mxu0 %v1179
  %1218 = vmatprep.subr.bf16.mxu0 0
  %1219 = vmatpush1.bf16.msra.mxu0 %v1180
  %1220 = vmatprep.subr.bf16.mxu0 0
  %1221 = vmatpush1.bf16.msra.mxu0 %v1181
  %1222 = vmatprep.subr.bf16.mxu0 0
  %1223 = vmatpush1.bf16.msra.mxu0 %v1182
  %1224 = vmatprep.subr.bf16.mxu0 0
  %1225 = vmatpush1.bf16.msra.mxu0 %v1183
  %1226 = vmatprep.subr.bf16.mxu0 0
  %1227 = vmatpush1.bf16.msra.mxu0 %v1184
  %1228 = vmatprep.subr.bf16.mxu0 0
  %1229 = vmatpush1.bf16.msra.mxu0 %v1185
  %1230 = vmatprep.subr.bf16.mxu0 0
  %1231 = vmatpush1.bf16.msra.mxu0 %v1186
  %1232 = vmatprep.subr.bf16.mxu0 0
  %1233 = vmatpush1.bf16.msra.mxu0 %v1187
  %1234 = vmatprep.subr.bf16.mxu0 0
  %1235 = vmatpush1.bf16.msra.mxu0 %v1188
  %1236 = vmatprep.subr.bf16.mxu0 0
  %1237 = vmatpush1.bf16.msra.mxu0 %v1189
  %1238 = vmatprep.mubr.bf16.mxu0 %v1077
  %1239 = vmatmul.mubr.bf16.gmra.mrb[0].mxu0 %v1076
  %v1240 = vpop.f32.mrb[0].mxu0
  %v1241 = vadd.f32 %v861, %v1240
  %v1242 = vpop.f32.mrb[0].mxu0
  %v1243 = vpop.f32.mrb[0].mxu0
  %v1244 = vadd.f32 %v861, %v1243
  %v1245 = vpop.f32.mrb[0].mxu0
  %1246 = vdwg.mxu0
  %v1247 = vsub.f32 0.0, %v1241
  %v1248 = vsub.f32 0.0, %v1244
  %v1249 = vmul.f32 %v1247, 1.442695
  %v1250 = vpow.pop %v1249
  %v1251 = vmul.f32 %v1248, 1.442695
  %v1252 = vpow.pop %v1251
  %v1253 = vadd.f32 %v1250, 1.0
  %v1254 = vadd.f32 %v1252, 1.0
  %v1255 = vrcp.pop %v1253
  %v1256 = vmul.f32 1.0, %v1255
  %v1257 = vrcp.pop %v1254
  %v1258 = vmul.f32 1.0, %v1257
  %v1259 = vmul.f32 %v1241, %v1256
  %v1260 = vmul.f32 %v1244, %v1258
  %v1261 = vpack.c.bf16 %v1260, %v1259
  %v1262 = vld [vmem:[%s11] sm:$0xff]
  %v1263 = vld [vmem:[%s11 + $0x8] sm:$0xf]
  %v1264 = vld [vmem:[%s11 + $0xc] sm:$0xff]
  %v1265 = vld [vmem:[%s11 + $0x14] sm:$0xf]
  %v1266 = vld [vmem:[%s11 + $0x18] sm:$0xff]
  %v1267 = vld [vmem:[%s11 + $0x20] sm:$0xf]
  %v1268 = vld [vmem:[%s11 + $0x24] sm:$0xff]
  %v1269 = vld [vmem:[%s11 + $0x2c] sm:$0xf]
  %v1270 = vld [vmem:[%s11 + $0x30] sm:$0xff]
  %v1271 = vld [vmem:[%s11 + $0x38] sm:$0xf]
  %v1272 = vld [vmem:[%s11 + $0x3c] sm:$0xff]
  %v1273 = vld [vmem:[%s11 + $0x44] sm:$0xf]
  %v1274 = vld [vmem:[%s11 + $0x48] sm:$0xff]
  %v1275 = vld [vmem:[%s11 + $0x50] sm:$0xf]
  %v1276 = vld [vmem:[%s11 + $0x54] sm:$0xff]
  %v1277 = vld [vmem:[%s11 + $0x5c] sm:$0xf]
  %v1278 = vld [vmem:[%s11 + $0x60] sm:$0xff]
  %v1279 = vld [vmem:[%s11 + $0x68] sm:$0xf]
  %v1280 = vld [vmem:[%s11 + $0x6c] sm:$0xff]
  %v1281 = vld [vmem:[%s11 + $0x74] sm:$0xf]
  %v1282 = vld [vmem:[%s11 + $0x78] sm:$0xff]
  %v1283 = vld [vmem:[%s11 + $0x80] sm:$0xf]
  %v1284 = vld [vmem:[%s11 + $0x84] sm:$0xff]
  %v1285 = vld [vmem:[%s11 + $0x8c] sm:$0xf]
  %v1286 = vld [vmem:[%s11 + $0x90] sm:$0xff]
  %v1287 = vld [vmem:[%s11 + $0x98] sm:$0xf]
  %v1288 = vld [vmem:[%s11 + $0x9c] sm:$0xff]
  %v1289 = vld [vmem:[%s11 + $0xa4] sm:$0xf]
  %v1290 = vld [vmem:[%s11 + $0xa8] sm:$0xff]
  %v1291 = vld [vmem:[%s11 + $0xb0] sm:$0xf]
  %v1292 = vld [vmem:[%s11 + $0xb4] sm:$0xff]
  %v1293 = vld [vmem:[%s11 + $0xbc] sm:$0xf]
  %v1326 = vunpack.c.l.b16 %v1262
  %v1327 = vunpack.c.h.b16 %v1262
  %v1328 = vunpack.c.l.b16 %v1263
  %v1329 = vunpack.c.l.b16 %v1264
  %v1330 = vunpack.c.h.b16 %v1264
  %v1331 = vunpack.c.l.b16 %v1265
  %v1332 = vunpack.c.l.b16 %v1266
  %v1333 = vunpack.c.h.b16 %v1266
  %v1334 = vunpack.c.l.b16 %v1267
  %v1335 = vunpack.c.l.b16 %v1268
  %v1336 = vunpack.c.h.b16 %v1268
  %v1337 = vunpack.c.l.b16 %v1269
  %v1338 = vunpack.c.l.b16 %v1270
  %v1339 = vunpack.c.h.b16 %v1270
  %v1340 = vunpack.c.l.b16 %v1271
  %v1341 = vunpack.c.l.b16 %v1272
  %v1342 = vunpack.c.h.b16 %v1272
  %v1343 = vunpack.c.l.b16 %v1273
  %v1344 = vunpack.c.l.b16 %v1274
  %v1345 = vunpack.c.h.b16 %v1274
  %v1346 = vunpack.c.l.b16 %v1275
  %v1347 = vunpack.c.l.b16 %v1276
  %v1348 = vunpack.c.h.b16 %v1276
  %v1349 = vunpack.c.l.b16 %v1277
  %v1350 = vunpack.c.l.b16 %v1278
  %v1351 = vunpack.c.h.b16 %v1278
  %v1352 = vunpack.c.l.b16 %v1279
  %v1353 = vunpack.c.l.b16 %v1280
  %v1354 = vunpack.c.h.b16 %v1280
  %v1355 = vunpack.c.l.b16 %v1281
  %v1356 = vunpack.c.l.b16 %v1282
  %v1357 = vunpack.c.h.b16 %v1282
  %v1358 = vunpack.c.l.b16 %v1283
  %v1359 = vunpack.c.l.b16 %v1284
  %v1360 = vunpack.c.h.b16 %v1284
  %v1361 = vunpack.c.l.b16 %v1285
  %v1362 = vunpack.c.l.b16 %v1286
  %v1363 = vunpack.c.h.b16 %v1286
  %v1364 = vunpack.c.l.b16 %v1287
  %v1365 = vunpack.c.l.b16 %v1288
  %v1366 = vunpack.c.h.b16 %v1288
  %v1367 = vunpack.c.l.b16 %v1289
  %v1368 = vunpack.c.l.b16 %v1290
  %v1369 = vunpack.c.h.b16 %v1290
  %v1370 = vunpack.c.l.b16 %v1291
  %v1371 = vunpack.c.l.b16 %v1292
  %v1372 = vunpack.c.h.b16 %v1292
  %v1373 = vunpack.c.l.b16 %v1293
  %v1374 = vpack.c.b16 %v1329, %v1326
  %v1375 = vpack.c.b16 %v1330, %v1327
  %v1376 = vpack.c.b16 %v1331, %v1328
  %v1377 = vpack.c.b16 %v1335, %v1332
  %v1378 = vpack.c.b16 %v1336, %v1333
  %v1379 = vpack.c.b16 %v1337, %v1334
  %v1380 = vpack.c.b16 %v1341, %v1338
  %v1381 = vpack.c.b16 %v1342, %v1339
  %v1382 = vpack.c.b16 %v1343, %v1340
  %v1383 = vpack.c.b16 %v1347, %v1344
  %v1384 = vpack.c.b16 %v1348, %v1345
  %v1385 = vpack.c.b16 %v1349, %v1346
  %v1386 = vpack.c.b16 %v1353, %v1350
  %v1387 = vpack.c.b16 %v1354, %v1351
  %v1388 = vpack.c.b16 %v1355, %v1352
  %v1389 = vpack.c.b16 %v1359, %v1356
  %v1390 = vpack.c.b16 %v1360, %v1357
  %v1391 = vpack.c.b16 %v1361, %v1358
  %v1392 = vpack.c.b16 %v1365, %v1362
  %v1393 = vpack.c.b16 %v1366, %v1363
  %v1394 = vpack.c.b16 %v1367, %v1364
  %v1395 = vpack.c.b16 %v1371, %v1368
  %v1396 = vpack.c.b16 %v1372, %v1369
  %v1397 = vpack.c.b16 %v1373, %v1370
  %1422 = vmatprep.subr.bf16.mxu0 %v1375
  %1423 = vmatpush1.bf16.msra.mxu0 %v1374
  %1424 = vmatprep.subr.bf16.mxu0 %v1378
  %1425 = vmatpush1.bf16.msra.mxu0 %v1377
  %1426 = vmatprep.subr.bf16.mxu0 %v1381
  %1427 = vmatpush1.bf16.msra.mxu0 %v1380
  %1428 = vmatprep.subr.bf16.mxu0 %v1384
  %1429 = vmatpush1.bf16.msra.mxu0 %v1383
  %1430 = vmatprep.subr.bf16.mxu0 %v1387
  %1431 = vmatpush1.bf16.msra.mxu0 %v1386
  %1432 = vmatprep.subr.bf16.mxu0 %v1390
  %1433 = vmatpush1.bf16.msra.mxu0 %v1389
  %1434 = vmatprep.subr.bf16.mxu0 %v1393
  %1435 = vmatpush1.bf16.msra.mxu0 %v1392
  %1436 = vmatprep.subr.bf16.mxu0 %v1396
  %1437 = vmatpush1.bf16.msra.mxu0 %v1395
  %1438 = vmatprep.subr.bf16.mxu0 0
  %1439 = vmatpush1.bf16.msra.mxu0 0
  %1440 = vmatprep.subr.bf16.mxu0 0
  %1441 = vmatpush1.bf16.msra.mxu0 0
  %1442 = vmatprep.subr.bf16.mxu0 0
  %1443 = vmatpush1.bf16.msra.mxu0 0
  %1444 = vmatprep.subr.bf16.mxu0 0
  %1445 = vmatpush1.bf16.msra.mxu0 0
  %1446 = vmatprep.subr.bf16.mxu0 0
  %1447 = vmatpush1.bf16.msra.mxu0 0
  %1448 = vmatprep.subr.bf16.mxu0 0
  %1449 = vmatpush1.bf16.msra.mxu0 0
  %1450 = vmatprep.subr.bf16.mxu0 0
  %1451 = vmatpush1.bf16.msra.mxu0 0
  %1452 = vmatprep.subr.bf16.mxu0 0
  %1453 = vmatpush1.bf16.msra.mxu0 0
  %1454 = vmatprep.mubr.bf16.mxu0 0
  %1455 = vmatmul.mubr.bf16.gmra.mrb[0].mxu0 %v1261
  %v1456 = vpop.f32.mrb[0].mxu0
  %v1457 = vadd.f32 %v868, %v1456
  %v1458 = vpop.f32.mrb[0].mxu0
  %v1459 = vadd.f32 %v872, %v1458
  %v1460 = vpop.f32.mrb[0].mxu0
  %v1461 = vadd.f32 %v868, %v1460
  %v1462 = vpop.f32.mrb[0].mxu0
  %v1463 = vadd.f32 %v872, %v1462
  %1464 = vdwg.mxu0
  %1465 = vmatprep.subr.bf16.mxu0 0
  %1466 = vmatpush1.bf16.msra.mxu0 %v1376
  %1467 = vmatprep.subr.bf16.mxu0 0
  %1468 = vmatpush1.bf16.msra.mxu0 %v1379
  %1469 = vmatprep.subr.bf16.mxu0 0
  %1470 = vmatpush1.bf16.msra.mxu0 %v1382
  %1471 = vmatprep.subr.bf16.mxu0 0
  %1472 = vmatpush1.bf16.msra.mxu0 %v1385
  %1473 = vmatprep.subr.bf16.mxu0 0
  %1474 = vmatpush1.bf16.msra.mxu0 %v1388
  %1475 = vmatprep.subr.bf16.mxu0 0
  %1476 = vmatpush1.bf16.msra.mxu0 %v1391
  %1477 = vmatprep.subr.bf16.mxu0 0
  %1478 = vmatpush1.bf16.msra.mxu0 %v1394
  %1479 = vmatprep.subr.bf16.mxu0 0
  %1480 = vmatpush1.bf16.msra.mxu0 %v1397
  %1481 = vmatprep.subr.bf16.mxu0 0
  %1482 = vmatpush1.bf16.msra.mxu0 0
  %1483 = vmatprep.subr.bf16.mxu0 0
  %1484 = vmatpush1.bf16.msra.mxu0 0
  %1485 = vmatprep.subr.bf16.mxu0 0
  %1486 = vmatpush1.bf16.msra.mxu0 0
  %1487 = vmatprep.subr.bf16.mxu0 0
  %1488 = vmatpush1.bf16.msra.mxu0 0
  %1489 = vmatprep.subr.bf16.mxu0 0
  %1490 = vmatpush1.bf16.msra.mxu0 0
  %1491 = vmatprep.subr.bf16.mxu0 0
  %1492 = vmatpush1.bf16.msra.mxu0 0
  %1493 = vmatprep.subr.bf16.mxu0 0
  %1494 = vmatpush1.bf16.msra.mxu0 0
  %1495 = vmatprep.subr.bf16.mxu0 0
  %1496 = vmatpush1.bf16.msra.mxu0 0
  %1497 = vmatprep.mubr.bf16.mxu0 0
  %1498 = vmatmul.mubr.bf16.gmra.mrb[0].mxu0 %v1261
  %v1499 = vpop.f32.mrb[0].mxu0
  %v1500 = vadd.f32 %v876, %v1499
  %v1501 = vpop.f32.mrb[0].mxu0
  %v1502 = vpop.f32.mrb[0].mxu0
  %v1503 = vadd.f32 %v876, %v1502
  %v1504 = vpop.f32.mrb[0].mxu0
  %1505 = vdwg.mxu0
  %v1506 = vmul.f32 %v1022, %v1024
  %v1507 = vmul.f32 %v1026, %v1028
  %v1508 = vmul.f32 %v1032, %v1034
  %v1509 = vmul.f32 %v1036, %v1038
  %v1510 = vadd.f32 %v1506, %v1508
  %v1511 = vadd.f32 %v1507, %v1509
  %v1512 = vmul.f32 %v1042, %v1044
  %v1513 = vmul.f32 %v1046, %v1048
  %v1514 = vadd.f32 %v1510, %v1512
  %v1515 = vadd.f32 %v1511, %v1513
  %v1516 = vmul.f32 %v1459, %v1514
  %v1517 = vmul.f32 %v1463, %v1515
  %v1518 = vadd.f32 %v880, %v1516
  %v1519 = vadd.f32 %v881, %v1517
  %v1520 = vadd.f32 %v1518, %v1500
  %v1521 = vadd.f32 %v1519, %v1503
  %v1522 = vmul.f32 %v1457, %v1022
  %v1523 = vmul.f32 %v1461, %v1026
  %v1524 = vmul.f32 %v1457, %v1032
  %v1525 = vmul.f32 %v1461, %v1036
  %v1526 = vmul.f32 %v1457, %v1042
  %v1527 = vmul.f32 %v1461, %v1046
  %v1528 = vadd.f32 %v882, %v1522
  %v1529 = vadd.f32 %v883, %v1523
  %v1530 = vadd.f32 %v884, %v1524
  %v1531 = vadd.f32 %v885, %v1525
  %v1532 = vadd.f32 %v886, %v1526
  %v1533 = vadd.f32 %v887, %v1527
  %v1534 = vadd.f32 %v1520, %v676
  %v1535 = vadd.f32 %v1521, %v679
  %v1536 = vadd.f32 %v1528, %v834
  %v1537 = vadd.f32 %v1529, %v837
  %v1538 = vadd.f32 %v1530, %v842
  %v1539 = vadd.f32 %v1531, %v845
  %v1540 = vadd.f32 %v1532, %v850
  %v1541 = vadd.f32 %v1533, %v853
  %v1542 = vpack.c.bf16 %v1537, %v1536
  %v1543 = vpack.c.bf16 %v1539, %v1538
  %v1544 = vpack.c.bf16 %v1541, %v1540
  %1545 = vmatprep.subr.bf16.mxu0 %v956
  %1546 = vmatpush1.bf16.msra.mxu0 %v955
  %1547 = vmatprep.subr.bf16.mxu0 %v958
  %1548 = vmatpush1.bf16.msra.mxu0 %v957
  %1549 = vmatprep.subr.bf16.mxu0 %v960
  %1550 = vmatpush1.bf16.msra.mxu0 %v959
  %1551 = vmatprep.subr.bf16.mxu0 %v962
  %1552 = vmatpush1.bf16.msra.mxu0 %v961
  %1553 = vmatprep.subr.bf16.mxu0 %v964
  %1554 = vmatpush1.bf16.msra.mxu0 %v963
  %1555 = vmatprep.subr.bf16.mxu0 %v966
  %1556 = vmatpush1.bf16.msra.mxu0 %v965
  %1557 = vmatprep.subr.bf16.mxu0 %v968
  %1558 = vmatpush1.bf16.msra.mxu0 %v967
  %1559 = vmatprep.subr.bf16.mxu0 %v970
  %1560 = vmatpush1.bf16.msra.mxu0 %v969
  %1561 = vmatprep.subr.bf16.mxu0 0
  %1562 = vmatpush1.bf16.msra.mxu0 0
  %1563 = vmatprep.subr.bf16.mxu0 0
  %1564 = vmatpush1.bf16.msra.mxu0 0
  %1565 = vmatprep.subr.bf16.mxu0 0
  %1566 = vmatpush1.bf16.msra.mxu0 0
  %1567 = vmatprep.subr.bf16.mxu0 0
  %1568 = vmatpush1.bf16.msra.mxu0 0
  %1569 = vmatprep.subr.bf16.mxu0 0
  %1570 = vmatpush1.bf16.msra.mxu0 0
  %1571 = vmatprep.subr.bf16.mxu0 0
  %1572 = vmatpush1.bf16.msra.mxu0 0
  %1573 = vmatprep.subr.bf16.mxu0 0
  %1574 = vmatpush1.bf16.msra.mxu0 0
  %1575 = vmatprep.subr.bf16.mxu0 0
  %1576 = vmatpush1.bf16.msra.mxu0 0
  %1577 = vmatprep.mubr.bf16.mxu0 0
  %1578 = vmatmul.mubr.bf16.gmra.mrb[0].mxu0 %v1542
  %v1579 = vpop.f32.mrb[0].mxu0
  %v1580 = vadd.f32 0.0, %v1579
  %v1581 = vpop.f32.mrb[0].mxu0
  %v1582 = vadd.f32 0.0, %v1581
  %v1583 = vpop.f32.mrb[0].mxu0
  %v1584 = vadd.f32 0.0, %v1583
  %v1585 = vpop.f32.mrb[0].mxu0
  %v1586 = vadd.f32 0.0, %v1585
  %1587 = vmatprep.mubr.bf16.mxu0 0
  %1588 = vmatmul.mubr.bf16.gmra.mrb[0].mxu0 %v1543
  %v1589 = vpop.f32.mrb[0].mxu0
  %v1590 = vadd.f32 0.0, %v1589
  %v1591 = vpop.f32.mrb[0].mxu0
  %v1592 = vadd.f32 0.0, %v1591
  %v1593 = vpop.f32.mrb[0].mxu0
  %v1594 = vadd.f32 0.0, %v1593
  %v1595 = vpop.f32.mrb[0].mxu0
  %v1596 = vadd.f32 0.0, %v1595
  %1597 = vmatprep.mubr.bf16.mxu0 0
  %1598 = vmatmul.mubr.bf16.gmra.mrb[0].mxu0 %v1544
  %v1599 = vpop.f32.mrb[0].mxu0
  %v1600 = vadd.f32 0.0, %v1599
  %v1601 = vpop.f32.mrb[0].mxu0
  %v1602 = vadd.f32 0.0, %v1601
  %v1603 = vpop.f32.mrb[0].mxu0
  %v1604 = vadd.f32 0.0, %v1603
  %v1605 = vpop.f32.mrb[0].mxu0
  %v1606 = vadd.f32 0.0, %v1605
  %1607 = vdwg.mxu0
  %v1608 = vmul.f32 %v1582, %v1582
  %v1609 = vmul.f32 %v1586, %v1586
  %v1610 = vmul.f32 %v1592, %v1592
  %v1611 = vmul.f32 %v1596, %v1596
  %v1612 = vadd.f32 %v1608, %v1610
  %v1613 = vadd.f32 %v1609, %v1611
  %v1614 = vmul.f32 %v1602, %v1602
  %v1615 = vmul.f32 %v1606, %v1606
  %v1616 = vadd.f32 %v1612, %v1614
  %v1617 = vadd.f32 %v1613, %v1615
  %v1618 = vadd.f32 %v1616, 1e-08
  %v1619 = vadd.f32 %v1617, 1e-08
  %v1620 = vrsqrt.pop %v1618
  %v1621 = vmul.f32 %v1618, %v1620
  %vm1622 = vcmp.eq.f32.partialorder %v1618, inf
  %v1623 = vsel %vm1622, %v1618, %v1621
  %vm1624 = vcmp.eq.f32.partialorder %v1618, 0.0
  %v1625 = vand.u32 %v1618, 2147483648
  %v1626 = vsel %vm1624, %v1625, %v1623
  %v1627 = vrsqrt.pop %v1619
  %v1628 = vmul.f32 %v1619, %v1627
  %vm1629 = vcmp.eq.f32.partialorder %v1619, inf
  %v1630 = vsel %vm1629, %v1619, %v1628
  %vm1631 = vcmp.eq.f32.partialorder %v1619, 0.0
  %v1632 = vand.u32 %v1619, 2147483648
  %v1633 = vsel %vm1631, %v1632, %v1630
  %v1634 = vpack.c.bf16 %v1535, %v1534
  %v1635 = vpack.c.bf16 %v1633, %v1626
  %1636 = vmatprep.subr.bf16.mxu0 0
  %1637 = vmatpush1.bf16.msra.mxu0 %v1174
  %1638 = vmatprep.subr.bf16.mxu0 0
  %1639 = vmatpush1.bf16.msra.mxu0 %v1175
  %1640 = vmatprep.subr.bf16.mxu0 0
  %1641 = vmatpush1.bf16.msra.mxu0 %v1176
  %1642 = vmatprep.subr.bf16.mxu0 0
  %1643 = vmatpush1.bf16.msra.mxu0 %v1177
  %1644 = vmatprep.subr.bf16.mxu0 0
  %1645 = vmatpush1.bf16.msra.mxu0 %v1178
  %1646 = vmatprep.subr.bf16.mxu0 0
  %1647 = vmatpush1.bf16.msra.mxu0 %v1179
  %1648 = vmatprep.subr.bf16.mxu0 0
  %1649 = vmatpush1.bf16.msra.mxu0 %v1180
  %1650 = vmatprep.subr.bf16.mxu0 0
  %1651 = vmatpush1.bf16.msra.mxu0 %v1181
  %1652 = vmatprep.subr.bf16.mxu0 0
  %1653 = vmatpush1.bf16.msra.mxu0 %v1182
  %1654 = vmatprep.subr.bf16.mxu0 0
  %1655 = vmatpush1.bf16.msra.mxu0 %v1183
  %1656 = vmatprep.subr.bf16.mxu0 0
  %1657 = vmatpush1.bf16.msra.mxu0 %v1184
  %1658 = vmatprep.subr.bf16.mxu0 0
  %1659 = vmatpush1.bf16.msra.mxu0 %v1185
  %1660 = vmatprep.subr.bf16.mxu0 0
  %1661 = vmatpush1.bf16.msra.mxu0 %v1186
  %1662 = vmatprep.subr.bf16.mxu0 0
  %1663 = vmatpush1.bf16.msra.mxu0 %v1187
  %1664 = vmatprep.subr.bf16.mxu0 0
  %1665 = vmatpush1.bf16.msra.mxu0 %v1188
  %1666 = vmatprep.subr.bf16.mxu0 0
  %1667 = vmatpush1.bf16.msra.mxu0 %v1189
  %1668 = vmatprep.mubr.bf16.mxu0 %v1635
  %1669 = vmatmul.mubr.bf16.gmra.mrb[0].mxu0 %v1634
  %v1670 = vpop.f32.mrb[0].mxu0
  %v1671 = vadd.f32 %v861, %v1670
  %v1672 = vpop.f32.mrb[0].mxu0
  %v1673 = vpop.f32.mrb[0].mxu0
  %v1674 = vadd.f32 %v861, %v1673
  %v1675 = vpop.f32.mrb[0].mxu0
  %1676 = vdwg.mxu0
  %v1677 = vsub.f32 0.0, %v1671
  %v1678 = vsub.f32 0.0, %v1674
  %v1679 = vmul.f32 %v1677, 1.442695
  %v1680 = vpow.pop %v1679
  %v1681 = vmul.f32 %v1678, 1.442695
  %v1682 = vpow.pop %v1681
  %v1683 = vadd.f32 %v1680, 1.0
  %v1684 = vadd.f32 %v1682, 1.0
  %v1685 = vrcp.pop %v1683
  %v1686 = vmul.f32 1.0, %v1685
  %v1687 = vrcp.pop %v1684
  %v1688 = vmul.f32 1.0, %v1687
  %v1689 = vmul.f32 %v1671, %v1686
  %v1690 = vmul.f32 %v1674, %v1688
  %v1691 = vpack.c.bf16 %v1690, %v1689
  %1692 = vmatprep.subr.bf16.mxu0 %v1375
  %1693 = vmatpush1.bf16.msra.mxu0 %v1374
  %1694 = vmatprep.subr.bf16.mxu0 %v1378
  %1695 = vmatpush1.bf16.msra.mxu0 %v1377
  %1696 = vmatprep.subr.bf16.mxu0 %v1381
  %1697 = vmatpush1.bf16.msra.mxu0 %v1380
  %1698 = vmatprep.subr.bf16.mxu0 %v1384
  %1699 = vmatpush1.bf16.msra.mxu0 %v1383
  %1700 = vmatprep.subr.bf16.mxu0 %v1387
  %1701 = vmatpush1.bf16.msra.mxu0 %v1386
  %1702 = vmatprep.subr.bf16.mxu0 %v1390
  %1703 = vmatpush1.bf16.msra.mxu0 %v1389
  %1704 = vmatprep.subr.bf16.mxu0 %v1393
  %1705 = vmatpush1.bf16.msra.mxu0 %v1392
  %1706 = vmatprep.subr.bf16.mxu0 %v1396
  %1707 = vmatpush1.bf16.msra.mxu0 %v1395
  %1708 = vmatprep.subr.bf16.mxu0 0
  %1709 = vmatpush1.bf16.msra.mxu0 0
  %1710 = vmatprep.subr.bf16.mxu0 0
  %1711 = vmatpush1.bf16.msra.mxu0 0
  %1712 = vmatprep.subr.bf16.mxu0 0
  %1713 = vmatpush1.bf16.msra.mxu0 0
  %1714 = vmatprep.subr.bf16.mxu0 0
  %1715 = vmatpush1.bf16.msra.mxu0 0
  %1716 = vmatprep.subr.bf16.mxu0 0
  %1717 = vmatpush1.bf16.msra.mxu0 0
  %1718 = vmatprep.subr.bf16.mxu0 0
  %1719 = vmatpush1.bf16.msra.mxu0 0
  %1720 = vmatprep.subr.bf16.mxu0 0
  %1721 = vmatpush1.bf16.msra.mxu0 0
  %1722 = vmatprep.subr.bf16.mxu0 0
  %1723 = vmatpush1.bf16.msra.mxu0 0
  %1724 = vmatprep.mubr.bf16.mxu0 0
  %1725 = vmatmul.mubr.bf16.gmra.mrb[0].mxu0 %v1691
  %v1726 = vpop.f32.mrb[0].mxu0
  %v1727 = vadd.f32 %v868, %v1726
  %v1728 = vpop.f32.mrb[0].mxu0
  %v1729 = vadd.f32 %v872, %v1728
  %v1730 = vpop.f32.mrb[0].mxu0
  %v1731 = vadd.f32 %v868, %v1730
  %v1732 = vpop.f32.mrb[0].mxu0
  %v1733 = vadd.f32 %v872, %v1732
  %1734 = vdwg.mxu0
  %1735 = vmatprep.subr.bf16.mxu0 0
  %1736 = vmatpush1.bf16.msra.mxu0 %v1376
  %1737 = vmatprep.subr.bf16.mxu0 0
  %1738 = vmatpush1.bf16.msra.mxu0 %v1379
  %1739 = vmatprep.subr.bf16.mxu0 0
  %1740 = vmatpush1.bf16.msra.mxu0 %v1382
  %1741 = vmatprep.subr.bf16.mxu0 0
  %1742 = vmatpush1.bf16.msra.mxu0 %v1385
  %1743 = vmatprep.subr.bf16.mxu0 0
  %1744 = vmatpush1.bf16.msra.mxu0 %v1388
  %1745 = vmatprep.subr.bf16.mxu0 0
  %1746 = vmatpush1.bf16.msra.mxu0 %v1391
  %1747 = vmatprep.subr.bf16.mxu0 0
  %1748 = vmatpush1.bf16.msra.mxu0 %v1394
  %1749 = vmatprep.subr.bf16.mxu0 0
  %1750 = vmatpush1.bf16.msra.mxu0 %v1397
  %1751 = vmatprep.subr.bf16.mxu0 0
  %1752 = vmatpush1.bf16.msra.mxu0 0
  %1753 = vmatprep.subr.bf16.mxu0 0
  %1754 = vmatpush1.bf16.msra.mxu0 0
  %1755 = vmatprep.subr.bf16.mxu0 0
  %1756 = vmatpush1.bf16.msra.mxu0 0
  %1757 = vmatprep.subr.bf16.mxu0 0
  %1758 = vmatpush1.bf16.msra.mxu0 0
  %1759 = vmatprep.subr.bf16.mxu0 0
  %1760 = vmatpush1.bf16.msra.mxu0 0
  %1761 = vmatprep.subr.bf16.mxu0 0
  %1762 = vmatpush1.bf16.msra.mxu0 0
  %1763 = vmatprep.subr.bf16.mxu0 0
  %1764 = vmatpush1.bf16.msra.mxu0 0
  %1765 = vmatprep.subr.bf16.mxu0 0
  %1766 = vmatpush1.bf16.msra.mxu0 0
  %1767 = vmatprep.mubr.bf16.mxu0 0
  %1768 = vmatmul.mubr.bf16.gmra.mrb[0].mxu0 %v1691
  %v1769 = vpop.f32.mrb[0].mxu0
  %v1770 = vadd.f32 %v876, %v1769
  %v1771 = vpop.f32.mrb[0].mxu0
  %v1772 = vpop.f32.mrb[0].mxu0
  %v1773 = vadd.f32 %v876, %v1772
  %v1774 = vpop.f32.mrb[0].mxu0
  %1775 = vdwg.mxu0
  %v1776 = vmul.f32 %v1580, %v1582
  %v1777 = vmul.f32 %v1584, %v1586
  %v1778 = vmul.f32 %v1590, %v1592
  %v1779 = vmul.f32 %v1594, %v1596
  %v1780 = vadd.f32 %v1776, %v1778
  %v1781 = vadd.f32 %v1777, %v1779
  %v1782 = vmul.f32 %v1600, %v1602
  %v1783 = vmul.f32 %v1604, %v1606
  %v1784 = vadd.f32 %v1780, %v1782
  %v1785 = vadd.f32 %v1781, %v1783
  %v1786 = vmul.f32 %v1729, %v1784
  %v1787 = vmul.f32 %v1733, %v1785
  %v1788 = vadd.f32 %v1534, %v1786
  %v1789 = vadd.f32 %v1535, %v1787
  %v1790 = vadd.f32 %v1788, %v1770
  %v1791 = vadd.f32 %v1789, %v1773
  %v1792 = vmul.f32 %v1727, %v1580
  %v1793 = vmul.f32 %v1731, %v1584
  %v1794 = vmul.f32 %v1727, %v1590
  %v1795 = vmul.f32 %v1731, %v1594
  %v1796 = vmul.f32 %v1727, %v1600
  %v1797 = vmul.f32 %v1731, %v1604
  %v1798 = vadd.f32 %v1536, %v1792
  %v1799 = vadd.f32 %v1537, %v1793
  %v1800 = vadd.f32 %v1538, %v1794
  %v1801 = vadd.f32 %v1539, %v1795
  %v1802 = vadd.f32 %v1540, %v1796
  %v1803 = vadd.f32 %v1541, %v1797
  %v1804 = vadd.f32 %v1790, %v676
  %v1805 = vadd.f32 %v1791, %v679
  %v1806 = vadd.f32 %v1798, %v834
  %v1807 = vadd.f32 %v1799, %v837
  %v1808 = vadd.f32 %v1800, %v842
  %v1809 = vadd.f32 %v1801, %v845
  %v1810 = vadd.f32 %v1802, %v850
  %v1811 = vadd.f32 %v1803, %v853
  %v1812 = vpack.c.bf16 %v1807, %v1806
  %v1813 = vpack.c.bf16 %v1809, %v1808
  %v1814 = vpack.c.bf16 %v1811, %v1810
  %1815 = vmatprep.subr.bf16.mxu0 %v956
  %1816 = vmatpush1.bf16.msra.mxu0 %v955
  %1817 = vmatprep.subr.bf16.mxu0 %v958
  %1818 = vmatpush1.bf16.msra.mxu0 %v957
  %1819 = vmatprep.subr.bf16.mxu0 %v960
  %1820 = vmatpush1.bf16.msra.mxu0 %v959
  %1821 = vmatprep.subr.bf16.mxu0 %v962
  %1822 = vmatpush1.bf16.msra.mxu0 %v961
  %1823 = vmatprep.subr.bf16.mxu0 %v964
  %1824 = vmatpush1.bf16.msra.mxu0 %v963
  %1825 = vmatprep.subr.bf16.mxu0 %v966
  %1826 = vmatpush1.bf16.msra.mxu0 %v965
  %1827 = vmatprep.subr.bf16.mxu0 %v968
  %1828 = vmatpush1.bf16.msra.mxu0 %v967
  %1829 = vmatprep.subr.bf16.mxu0 %v970
  %1830 = vmatpush1.bf16.msra.mxu0 %v969
  %1831 = vmatprep.subr.bf16.mxu0 0
  %1832 = vmatpush1.bf16.msra.mxu0 0
  %1833 = vmatprep.subr.bf16.mxu0 0
  %1834 = vmatpush1.bf16.msra.mxu0 0
  %1835 = vmatprep.subr.bf16.mxu0 0
  %1836 = vmatpush1.bf16.msra.mxu0 0
  %1837 = vmatprep.subr.bf16.mxu0 0
  %1838 = vmatpush1.bf16.msra.mxu0 0
  %1839 = vmatprep.subr.bf16.mxu0 0
  %1840 = vmatpush1.bf16.msra.mxu0 0
  %1841 = vmatprep.subr.bf16.mxu0 0
  %1842 = vmatpush1.bf16.msra.mxu0 0
  %1843 = vmatprep.subr.bf16.mxu0 0
  %1844 = vmatpush1.bf16.msra.mxu0 0
  %1845 = vmatprep.subr.bf16.mxu0 0
  %1846 = vmatpush1.bf16.msra.mxu0 0
  %1847 = vmatprep.mubr.bf16.mxu0 0
  %1848 = vmatmul.mubr.bf16.gmra.mrb[0].mxu0 %v1812
  %v1849 = vpop.f32.mrb[0].mxu0
  %v1850 = vadd.f32 0.0, %v1849
  %v1851 = vpop.f32.mrb[0].mxu0
  %v1852 = vadd.f32 0.0, %v1851
  %v1853 = vpop.f32.mrb[0].mxu0
  %v1854 = vadd.f32 0.0, %v1853
  %v1855 = vpop.f32.mrb[0].mxu0
  %v1856 = vadd.f32 0.0, %v1855
  %1857 = vmatprep.mubr.bf16.mxu0 0
  %1858 = vmatmul.mubr.bf16.gmra.mrb[0].mxu0 %v1813
  %v1859 = vpop.f32.mrb[0].mxu0
  %v1860 = vadd.f32 0.0, %v1859
  %v1861 = vpop.f32.mrb[0].mxu0
  %v1862 = vadd.f32 0.0, %v1861
  %v1863 = vpop.f32.mrb[0].mxu0
  %v1864 = vadd.f32 0.0, %v1863
  %v1865 = vpop.f32.mrb[0].mxu0
  %v1866 = vadd.f32 0.0, %v1865
  %1867 = vmatprep.mubr.bf16.mxu0 0
  %1868 = vmatmul.mubr.bf16.gmra.mrb[0].mxu0 %v1814
  %v1869 = vpop.f32.mrb[0].mxu0
  %v1870 = vadd.f32 0.0, %v1869
  %v1871 = vpop.f32.mrb[0].mxu0
  %v1872 = vadd.f32 0.0, %v1871
  %v1873 = vpop.f32.mrb[0].mxu0
  %v1874 = vadd.f32 0.0, %v1873
  %v1875 = vpop.f32.mrb[0].mxu0
  %v1876 = vadd.f32 0.0, %v1875
  %1877 = vdwg.mxu0
  %v1878 = vmul.f32 %v1852, %v1852
  %v1879 = vmul.f32 %v1856, %v1856
  %v1880 = vmul.f32 %v1862, %v1862
  %v1881 = vmul.f32 %v1866, %v1866
  %v1882 = vadd.f32 %v1878, %v1880
  %v1883 = vadd.f32 %v1879, %v1881
  %v1884 = vmul.f32 %v1872, %v1872
  %v1885 = vmul.f32 %v1876, %v1876
  %v1886 = vadd.f32 %v1882, %v1884
  %v1887 = vadd.f32 %v1883, %v1885
  %v1888 = vadd.f32 %v1886, 1e-08
  %v1889 = vadd.f32 %v1887, 1e-08
  %v1890 = vrsqrt.pop %v1888
  %v1891 = vmul.f32 %v1888, %v1890
  %vm1892 = vcmp.eq.f32.partialorder %v1888, inf
  %v1893 = vsel %vm1892, %v1888, %v1891
  %vm1894 = vcmp.eq.f32.partialorder %v1888, 0.0
  %v1895 = vand.u32 %v1888, 2147483648
  %v1896 = vsel %vm1894, %v1895, %v1893
  %v1897 = vrsqrt.pop %v1889
  %v1898 = vmul.f32 %v1889, %v1897
  %vm1899 = vcmp.eq.f32.partialorder %v1889, inf
  %v1900 = vsel %vm1899, %v1889, %v1898
  %vm1901 = vcmp.eq.f32.partialorder %v1889, 0.0
  %v1902 = vand.u32 %v1889, 2147483648
  %v1903 = vsel %vm1901, %v1902, %v1900
  %v1904 = vpack.c.bf16 %v1805, %v1804
  %v1905 = vpack.c.bf16 %v1903, %v1896
  %1906 = vmatprep.subr.bf16.mxu0 0
  %1907 = vmatpush1.bf16.msra.mxu0 %v1174
  %1908 = vmatprep.subr.bf16.mxu0 0
  %1909 = vmatpush1.bf16.msra.mxu0 %v1175
  %1910 = vmatprep.subr.bf16.mxu0 0
  %1911 = vmatpush1.bf16.msra.mxu0 %v1176
  %1912 = vmatprep.subr.bf16.mxu0 0
  %1913 = vmatpush1.bf16.msra.mxu0 %v1177
  %1914 = vmatprep.subr.bf16.mxu0 0
  %1915 = vmatpush1.bf16.msra.mxu0 %v1178
  %1916 = vmatprep.subr.bf16.mxu0 0
  %1917 = vmatpush1.bf16.msra.mxu0 %v1179
  %1918 = vmatprep.subr.bf16.mxu0 0
  %1919 = vmatpush1.bf16.msra.mxu0 %v1180
  %1920 = vmatprep.subr.bf16.mxu0 0
  %1921 = vmatpush1.bf16.msra.mxu0 %v1181
  %1922 = vmatprep.subr.bf16.mxu0 0
  %1923 = vmatpush1.bf16.msra.mxu0 %v1182
  %1924 = vmatprep.subr.bf16.mxu0 0
  %1925 = vmatpush1.bf16.msra.mxu0 %v1183
  %1926 = vmatprep.subr.bf16.mxu0 0
  %1927 = vmatpush1.bf16.msra.mxu0 %v1184
  %1928 = vmatprep.subr.bf16.mxu0 0
  %1929 = vmatpush1.bf16.msra.mxu0 %v1185
  %1930 = vmatprep.subr.bf16.mxu0 0
  %1931 = vmatpush1.bf16.msra.mxu0 %v1186
  %1932 = vmatprep.subr.bf16.mxu0 0
  %1933 = vmatpush1.bf16.msra.mxu0 %v1187
  %1934 = vmatprep.subr.bf16.mxu0 0
  %1935 = vmatpush1.bf16.msra.mxu0 %v1188
  %1936 = vmatprep.subr.bf16.mxu0 0
  %1937 = vmatpush1.bf16.msra.mxu0 %v1189
  %1938 = vmatprep.mubr.bf16.mxu0 %v1905
  %1939 = vmatmul.mubr.bf16.gmra.mrb[0].mxu0 %v1904
  %v1940 = vpop.f32.mrb[0].mxu0
  %v1941 = vadd.f32 %v861, %v1940
  %v1942 = vpop.f32.mrb[0].mxu0
  %v1943 = vpop.f32.mrb[0].mxu0
  %v1944 = vadd.f32 %v861, %v1943
  %v1945 = vpop.f32.mrb[0].mxu0
  %1946 = vdwg.mxu0
  %v1947 = vsub.f32 0.0, %v1941
  %v1948 = vsub.f32 0.0, %v1944
  %v1949 = vmul.f32 %v1947, 1.442695
  %v1950 = vpow.pop %v1949
  %v1951 = vmul.f32 %v1948, 1.442695
  %v1952 = vpow.pop %v1951
  %v1953 = vadd.f32 %v1950, 1.0
  %v1954 = vadd.f32 %v1952, 1.0
  %v1955 = vrcp.pop %v1953
  %v1956 = vmul.f32 1.0, %v1955
  %v1957 = vrcp.pop %v1954
  %v1958 = vmul.f32 1.0, %v1957
  %v1959 = vmul.f32 %v1941, %v1956
  %v1960 = vmul.f32 %v1944, %v1958
  %v1961 = vpack.c.bf16 %v1960, %v1959
  %1962 = vmatprep.subr.bf16.mxu0 %v1375
  %1963 = vmatpush1.bf16.msra.mxu0 %v1374
  %1964 = vmatprep.subr.bf16.mxu0 %v1378
  %1965 = vmatpush1.bf16.msra.mxu0 %v1377
  %1966 = vmatprep.subr.bf16.mxu0 %v1381
  %1967 = vmatpush1.bf16.msra.mxu0 %v1380
  %1968 = vmatprep.subr.bf16.mxu0 %v1384
  %1969 = vmatpush1.bf16.msra.mxu0 %v1383
  %1970 = vmatprep.subr.bf16.mxu0 %v1387
  %1971 = vmatpush1.bf16.msra.mxu0 %v1386
  %1972 = vmatprep.subr.bf16.mxu0 %v1390
  %1973 = vmatpush1.bf16.msra.mxu0 %v1389
  %1974 = vmatprep.subr.bf16.mxu0 %v1393
  %1975 = vmatpush1.bf16.msra.mxu0 %v1392
  %1976 = vmatprep.subr.bf16.mxu0 %v1396
  %1977 = vmatpush1.bf16.msra.mxu0 %v1395
  %1978 = vmatprep.subr.bf16.mxu0 0
  %1979 = vmatpush1.bf16.msra.mxu0 0
  %1980 = vmatprep.subr.bf16.mxu0 0
  %1981 = vmatpush1.bf16.msra.mxu0 0
  %1982 = vmatprep.subr.bf16.mxu0 0
  %1983 = vmatpush1.bf16.msra.mxu0 0
  %1984 = vmatprep.subr.bf16.mxu0 0
  %1985 = vmatpush1.bf16.msra.mxu0 0
  %1986 = vmatprep.subr.bf16.mxu0 0
  %1987 = vmatpush1.bf16.msra.mxu0 0
  %1988 = vmatprep.subr.bf16.mxu0 0
  %1989 = vmatpush1.bf16.msra.mxu0 0
  %1990 = vmatprep.subr.bf16.mxu0 0
  %1991 = vmatpush1.bf16.msra.mxu0 0
  %1992 = vmatprep.subr.bf16.mxu0 0
  %1993 = vmatpush1.bf16.msra.mxu0 0
  %1994 = vmatprep.mubr.bf16.mxu0 0
  %1995 = vmatmul.mubr.bf16.gmra.mrb[0].mxu0 %v1961
  %v1996 = vpop.f32.mrb[0].mxu0
  %v1997 = vpop.f32.mrb[0].mxu0
  %v1998 = vadd.f32 %v872, %v1997
  %v1999 = vpop.f32.mrb[0].mxu0
  %v2000 = vpop.f32.mrb[0].mxu0
  %v2001 = vadd.f32 %v872, %v2000
  %2002 = vdwg.mxu0
  %2003 = vmatprep.subr.bf16.mxu0 0
  %2004 = vmatpush1.bf16.msra.mxu0 %v1376
  %2005 = vmatprep.subr.bf16.mxu0 0
  %2006 = vmatpush1.bf16.msra.mxu0 %v1379
  %2007 = vmatprep.subr.bf16.mxu0 0
  %2008 = vmatpush1.bf16.msra.mxu0 %v1382
  %2009 = vmatprep.subr.bf16.mxu0 0
  %2010 = vmatpush1.bf16.msra.mxu0 %v1385
  %2011 = vmatprep.subr.bf16.mxu0 0
  %2012 = vmatpush1.bf16.msra.mxu0 %v1388
  %2013 = vmatprep.subr.bf16.mxu0 0
  %2014 = vmatpush1.bf16.msra.mxu0 %v1391
  %2015 = vmatprep.subr.bf16.mxu0 0
  %2016 = vmatpush1.bf16.msra.mxu0 %v1394
  %2017 = vmatprep.subr.bf16.mxu0 0
  %2018 = vmatpush1.bf16.msra.mxu0 %v1397
  %2019 = vmatprep.subr.bf16.mxu0 0
  %2020 = vmatpush1.bf16.msra.mxu0 0
  %2021 = vmatprep.subr.bf16.mxu0 0
  %2022 = vmatpush1.bf16.msra.mxu0 0
  %2023 = vmatprep.subr.bf16.mxu0 0
  %2024 = vmatpush1.bf16.msra.mxu0 0
  %2025 = vmatprep.subr.bf16.mxu0 0
  %2026 = vmatpush1.bf16.msra.mxu0 0
  %2027 = vmatprep.subr.bf16.mxu0 0
  %2028 = vmatpush1.bf16.msra.mxu0 0
  %2029 = vmatprep.subr.bf16.mxu0 0
  %2030 = vmatpush1.bf16.msra.mxu0 0
  %2031 = vmatprep.subr.bf16.mxu0 0
  %2032 = vmatpush1.bf16.msra.mxu0 0
  %2033 = vmatprep.subr.bf16.mxu0 0
  %2034 = vmatpush1.bf16.msra.mxu0 0
  %2035 = vmatprep.mubr.bf16.mxu0 0
  %2036 = vmatmul.mubr.bf16.gmra.mrb[0].mxu0 %v1961
  %v2037 = vpop.f32.mrb[0].mxu0
  %v2038 = vadd.f32 %v876, %v2037
  %v2039 = vpop.f32.mrb[0].mxu0
  %v2040 = vpop.f32.mrb[0].mxu0
  %v2041 = vadd.f32 %v876, %v2040
  %v2042 = vpop.f32.mrb[0].mxu0
  %2043 = vdwg.mxu0
  %v2044 = vmul.f32 %v1850, %v1852
  %v2045 = vmul.f32 %v1854, %v1856
  %v2046 = vmul.f32 %v1860, %v1862
  %v2047 = vmul.f32 %v1864, %v1866
  %v2048 = vadd.f32 %v2044, %v2046
  %v2049 = vadd.f32 %v2045, %v2047
  %v2050 = vmul.f32 %v1870, %v1872
  %v2051 = vmul.f32 %v1874, %v1876
  %v2052 = vadd.f32 %v2048, %v2050
  %v2053 = vadd.f32 %v2049, %v2051
  %v2054 = vmul.f32 %v1998, %v2052
  %v2055 = vmul.f32 %v2001, %v2053
  %v2056 = vadd.f32 %v1804, %v2054
  %v2057 = vadd.f32 %v1805, %v2055
  %v2058 = vadd.f32 %v2056, %v2038
  %v2059 = vadd.f32 %v2057, %v2041
  %v2060 = vpack.c.bf16 %v2059, %v2058
  %v2061 = vld [vmem:[%s13] sm:$0xf]
  %v2062 = vld [vmem:[%s13 + $0x4] sm:$0xf]
  %v2063 = vld [vmem:[%s13 + $0x8] sm:$0xf]
  %v2064 = vld [vmem:[%s13 + $0xc] sm:$0xf]
  %v2065 = vld [vmem:[%s13 + $0x10] sm:$0xf]
  %v2066 = vld [vmem:[%s13 + $0x14] sm:$0xf]
  %v2067 = vld [vmem:[%s13 + $0x18] sm:$0xf]
  %v2068 = vld [vmem:[%s13 + $0x1c] sm:$0xf]
  %v2069 = vld [vmem:[%s13 + $0x20] sm:$0xf]
  %v2070 = vld [vmem:[%s13 + $0x24] sm:$0xf]
  %v2071 = vld [vmem:[%s13 + $0x28] sm:$0xf]
  %v2072 = vld [vmem:[%s13 + $0x2c] sm:$0xf]
  %v2073 = vld [vmem:[%s13 + $0x30] sm:$0xf]
  %v2074 = vld [vmem:[%s13 + $0x34] sm:$0xf]
  %v2075 = vld [vmem:[%s13 + $0x38] sm:$0xf]
  %v2076 = vld [vmem:[%s13 + $0x3c] sm:$0xf]
  %v2077 = vld [vmem:[%s14] sm:$0x1]
  %v2079 = vlaneseq
  %v2080 = vshrl.u32 %v2079, 7
  %v2081 = vsub.s32 0, %v2080
  %v2082 = vrot.slane %v2077, %v2081
  %v2100 = vunpack.c.l.b16 %v2061
  %v2101 = vunpack.c.l.b16 %v2062
  %v2102 = vunpack.c.l.b16 %v2063
  %v2103 = vunpack.c.l.b16 %v2064
  %v2104 = vunpack.c.l.b16 %v2065
  %v2105 = vunpack.c.l.b16 %v2066
  %v2106 = vunpack.c.l.b16 %v2067
  %v2107 = vunpack.c.l.b16 %v2068
  %v2108 = vunpack.c.l.b16 %v2069
  %v2109 = vunpack.c.l.b16 %v2070
  %v2110 = vunpack.c.l.b16 %v2071
  %v2111 = vunpack.c.l.b16 %v2072
  %v2112 = vunpack.c.l.b16 %v2073
  %v2113 = vunpack.c.l.b16 %v2074
  %v2114 = vunpack.c.l.b16 %v2075
  %v2115 = vunpack.c.l.b16 %v2076
  %v2116 = vpack.c.b16 %v2101, %v2100
  %v2117 = vpack.c.b16 %v2103, %v2102
  %v2118 = vpack.c.b16 %v2105, %v2104
  %v2119 = vpack.c.b16 %v2107, %v2106
  %v2120 = vpack.c.b16 %v2109, %v2108
  %v2121 = vpack.c.b16 %v2111, %v2110
  %v2122 = vpack.c.b16 %v2113, %v2112
  %v2123 = vpack.c.b16 %v2115, %v2114
  %2132 = vmatprep.subr.bf16.mxu0 0
  %2133 = vmatpush1.bf16.msra.mxu0 %v2116
  %2134 = vmatprep.subr.bf16.mxu0 0
  %2135 = vmatpush1.bf16.msra.mxu0 %v2117
  %2136 = vmatprep.subr.bf16.mxu0 0
  %2137 = vmatpush1.bf16.msra.mxu0 %v2118
  %2138 = vmatprep.subr.bf16.mxu0 0
  %2139 = vmatpush1.bf16.msra.mxu0 %v2119
  %2140 = vmatprep.subr.bf16.mxu0 0
  %2141 = vmatpush1.bf16.msra.mxu0 %v2120
  %2142 = vmatprep.subr.bf16.mxu0 0
  %2143 = vmatpush1.bf16.msra.mxu0 %v2121
  %2144 = vmatprep.subr.bf16.mxu0 0
  %2145 = vmatpush1.bf16.msra.mxu0 %v2122
  %2146 = vmatprep.subr.bf16.mxu0 0
  %2147 = vmatpush1.bf16.msra.mxu0 %v2123
  %2148 = vmatprep.subr.bf16.mxu0 0
  %2149 = vmatpush1.bf16.msra.mxu0 0
  %2150 = vmatprep.subr.bf16.mxu0 0
  %2151 = vmatpush1.bf16.msra.mxu0 0
  %2152 = vmatprep.subr.bf16.mxu0 0
  %2153 = vmatpush1.bf16.msra.mxu0 0
  %2154 = vmatprep.subr.bf16.mxu0 0
  %2155 = vmatpush1.bf16.msra.mxu0 0
  %2156 = vmatprep.subr.bf16.mxu0 0
  %2157 = vmatpush1.bf16.msra.mxu0 0
  %2158 = vmatprep.subr.bf16.mxu0 0
  %2159 = vmatpush1.bf16.msra.mxu0 0
  %2160 = vmatprep.subr.bf16.mxu0 0
  %2161 = vmatpush1.bf16.msra.mxu0 0
  %2162 = vmatprep.subr.bf16.mxu0 0
  %2163 = vmatpush1.bf16.msra.mxu0 0
  %2164 = vmatprep.mubr.bf16.mxu0 0
  %2165 = vmatmul.mubr.bf16.gmra.mrb[0].mxu0 %v2060
  %v2166 = vpop.f32.mrb[0].mxu0
  %v2167 = vadd.f32 %v2082, %v2166
  %v2168 = vpop.f32.mrb[0].mxu0
  %v2169 = vpop.f32.mrb[0].mxu0
  %v2170 = vadd.f32 %v2082, %v2169
  %v2171 = vpop.f32.mrb[0].mxu0
  %2172 = vdwg.mxu0
  %v2173 = vsub.f32 0.0, %v2167
  %v2174 = vsub.f32 0.0, %v2170
  %v2175 = vmul.f32 %v2173, 1.442695
  %v2176 = vpow.pop %v2175
  %v2177 = vmul.f32 %v2174, 1.442695
  %v2178 = vpow.pop %v2177
  %v2179 = vadd.f32 %v2176, 1.0
  %v2180 = vadd.f32 %v2178, 1.0
  %v2181 = vrcp.pop %v2179
  %v2182 = vmul.f32 1.0, %v2181
  %v2183 = vrcp.pop %v2180
  %v2184 = vmul.f32 1.0, %v2183
  %v2185 = vmul.f32 %v2167, %v2182
  %v2186 = vmul.f32 %v2170, %v2184
  %v2187 = vld [vmem:[%s15] sm:$0x1]
  %v2189 = vlaneseq
  %v2190 = vshrl.u32 %v2189, 7
  %v2191 = vsub.s32 0, %v2190
  %v2192 = vrot.slane %v2187, %v2191
  %v2194 = vmul.f32 %v2185, %v2192
  %v2195 = vmul.f32 %v2186, %v2192
  %vm2196 = vcmask 523264
  %v2197 = vsel %vm2196, %v2194, 0.0
  %2198 = vadd.xlane.f32.xlu0 %v2197
  %v2199 = vpop.xlane.xlu0 %2198
  %v2200 = vsel %vm2196, %v2195, 0.0
  %2201 = vadd.xlane.f32.xlu0 %v2200
  %v2202 = vpop.xlane.xlu0 %2201
  %v2203 = vld [vmem:[#allocation2] sm:$0x1]
  %v2205 = vlaneseq
  %v2206 = vshrl.u32 %v2205, 7
  %v2207 = vsub.s32 0, %v2206
  %v2208 = vrot.slane %v2203, %v2207
  %v2210 = vadd.f32 %v2199, %v2208
  %v2211 = vadd.f32 %v2202, %v2208
  %vm2212 = vcmask 7168
  %2213 = vst.msk [vmem:[%s17] sm:$0xff] %vm2212, %v2210
  %2214 = vst.msk [vmem:[%s17 + $0x8] sm:$0xff] %vm2212, %v2211
  // Predicated region
  $region70: #{painn_forward.1} parent=0 // pred_check
    _
  $region71: #{painn_forward.1} parent=0 // pred_check_branch
    %2216 = sbr.rel (0) target = $region73
  $region72: #{painn_forward.1} parent=0 // pred_region
    _
  $region73: #{painn_forward.1} parent=0 // pred_fallthru
    _
  // Predicated region
  $region74: #{painn_forward.1} parent=0 // pred_check
    _
  $region75: #{painn_forward.1} parent=0 // pred_check_branch
    %2218 = sbr.rel (0) target = $region77
  $region76: #{painn_forward.1} parent=0 // pred_region
    _
  $region77: #{painn_forward.1} parent=0 // pred_fallthru
    _

</llo_original>
